<compile_context>
chip_gen: v7x
topology: tpu7x:2x2x1
jax: 0.10.0
libtpu: 0.0.40
codegen_flags: <defaults>
</compile_context>

<pallas_src>
import math
import jax
import jax.numpy as jnp
from jax.experimental import pallas as pl
from jax.experimental.pallas import tpu as pltpu

B, S, D, H, DFF = 2, 8, 32, 4, 64     # batch, seq, d_model, heads, d_ff
DK = D // H
EPS = 1e-6                            # LayerNormalization eps (added to std, tutorial-style)
N = B * S                             # total rows handled by the single kernel invocation
BIAS_W = 128                          # lane-dense row width of the packed bias array


def encoder_block_kernel(x_ref, bias_ref, ln_ref,
                         wqkv_ref, wo_ref, w1_ref, w2_ref, bpack_ref,
                         o_ref):
    x = x_ref[...]                                   # (N, D) f32

    a1 = ln_ref[0, 0]
    c1 = ln_ref[0, 1]
    a2 = ln_ref[0, 2]
    c2 = ln_ref[0, 3]

    def layer_norm(v, alpha, cbias):
        # one-pass stats: sum and sum-of-squares are independent XLU reductions
        s = jnp.sum(v, axis=-1, keepdims=True)
        sq = jnp.sum(v * v, axis=-1, keepdims=True)
        mean = s * (1.0 / D)
        var = (sq - D * mean * mean) * (1.0 / (D - 1))   # ddof=1 (torch .std() style)
        # rsqrt(var + eps) ~= 1/(std + eps) to ~1e-6 relative for eps = 1e-6
        inv = jax.lax.rsqrt(var + EPS)
        return alpha * (v - mean) * inv + cbias

    # ---------------- sublayer 1: pre-norm multi-head attention + residual ----------
    xn = layer_norm(x, a1, c1)

    # Fused QKV projection: single lane-dense bf16 matmul (16,32)@(32,96), one bias add.
    qkv = jnp.dot(xn.astype(jnp.bfloat16), wqkv_ref[...],
                  preferred_element_type=jnp.float32) + bpack_ref[0:1, 0:3 * D]
    q = qkv[:, 0:D]            # 1/sqrt(DK) already folded into Wq / bq in the wrapper
    k = qkv[:, D:2 * D]
    v = qkv[:, 2 * D:3 * D]
    kt = k.T                   # (D, N): single f32 XLU transpose shared by all heads

    # Scores for every (batch, head) tile; softmax applied once on the stacked tile.
    sc_list = []
    for b in range(B):                               # static unroll, B*H small
        sb = bias_ref[b]                             # (S, S) additive mask bias
        for h in range(H):
            qh = q[b * S:(b + 1) * S, h * DK:(h + 1) * DK].astype(jnp.bfloat16)
            kh_t = kt[h * DK:(h + 1) * DK, b * S:(b + 1) * S].astype(jnp.bfloat16)
            sc_list.append(jnp.dot(qh, kh_t, preferred_element_type=jnp.float32) + sb)
    sc_all = jnp.concatenate(sc_list, axis=0)        # (B*H*S, S)
    sc_all = sc_all - jnp.max(sc_all, axis=-1, keepdims=True)
    p_all = jnp.exp(sc_all)
    p_all = p_all * pl.reciprocal(jnp.sum(p_all, axis=-1, keepdims=True), approx=True)

    # Per-head attention outputs, assembled head-major into one (N, D) buffer so the
    # output projection is a single matmul.
    head_cols = []
    for h in range(H):
        parts = []
        for b in range(B):
            idx = b * H + h
            ph = p_all[idx * S:(idx + 1) * S, :].astype(jnp.bfloat16)           # (S, S)
            vh = v[b * S:(b + 1) * S, h * DK:(h + 1) * DK].astype(jnp.bfloat16)  # (S, DK)
            parts.append(jnp.dot(ph, vh, preferred_element_type=jnp.float32))
        head_cols.append(jnp.concatenate(parts, axis=0))                        # (N, DK)
    attn = jnp.concatenate(head_cols, axis=1)                                   # (N, D)

    # Single Wo projection + residual.
    # TODO(synk): dropout treated as identity (eval/inference mode)
    x1 = x + jnp.dot(attn.astype(jnp.bfloat16), wo_ref[...],
                     preferred_element_type=jnp.float32) + bpack_ref[1:2, 0:D]

    # ---------------- sublayer 2: pre-norm feed-forward + residual -------------------
    xn2 = layer_norm(x1, a2, c2)
    h1 = jnp.dot(xn2.astype(jnp.bfloat16), w1_ref[...],
                 preferred_element_type=jnp.float32) + bpack_ref[2:3, 0:DFF]
    h1 = jnp.maximum(h1, 0.0)
    ff = jnp.dot(h1.astype(jnp.bfloat16), w2_ref[...],
                 preferred_element_type=jnp.float32) + bpack_ref[3:4, 0:D]
    o_ref[...] = x1 + ff


def encoder_block(x, mask, ln, wq, bq, wk, bk, wv, bv, wo, bo, w1, b1, w2, b2):
    # Weight fusion / repacking, bf16 casting and mask -> additive-bias conversion all
    # happen here as cheap one-off XLA ops outside the kernel.
    scale = 1.0 / math.sqrt(DK)
    wqkv = jnp.concatenate([wq * scale, wk, wv], axis=1).astype(jnp.bfloat16)   # (D, 3D)
    bqkv = jnp.concatenate([bq * scale, bk, bv], axis=1)                        # (1, 3D)

    def pad_row(bvec):
        bvec = bvec.reshape(1, -1)
        return jnp.pad(bvec, ((0, 0), (0, BIAS_W - bvec.shape[1])))

    # one bias pack, one row per bias, all at lane offset 0 (aligned in-kernel loads)
    bpack = jnp.concatenate([pad_row(bqkv), pad_row(bo), pad_row(b1), pad_row(b2)],
                            axis=0).astype(jnp.float32)                         # (4, 128)

    # mask is identical across heads here -> take head 0 and convert to additive bias
    mask_bias = jnp.where(mask[:, 0] == 0, -1e9, 0.0).astype(jnp.float32)        # (B, S, S)
    x2d = x.reshape(N, D)

    def full(shape):
        nd = len(shape)
        return pl.BlockSpec(shape, lambda i, nd=nd: (0,) * nd)

    in_specs = [
        full((N, D)),                                        # x: all B*S rows at once
        full((B, S, S)),                                     # additive mask bias
        pl.BlockSpec(memory_space=pltpu.MemorySpace.SMEM),   # layernorm scalars
        full((D, 3 * D)),                                    # fused QKV weights (bf16)
        full((D, D)),                                        # wo (bf16)
        full((D, DFF)),                                      # w1 (bf16)
        full((DFF, D)),                                      # w2 (bf16)
        full((4, BIAS_W)),                                   # packed biases
    ]
    out = pl.pallas_call(
        encoder_block_kernel,
        grid=(1,),                                           # single invocation / single TC
        in_specs=in_specs,
        out_specs=full((N, D)),
        out_shape=jax.ShapeDtypeStruct((N, D), jnp.float32),
        compiler_params=pltpu.CompilerParams(dimension_semantics=("arbitrary",)),
    )(x2d, mask_bias, ln, wqkv, wo.astype(jnp.bfloat16),
      w1.astype(jnp.bfloat16), w2.astype(jnp.bfloat16), bpack)
    return out.reshape(B, S, D)


def reference_forward(x, mask, ln, wq, bq, wk, bk, wv, bv, wo, bo, w1, b1, w2, b2):
    """Plain-JAX reference of the same forward pass (for a sanity check)."""
    def layer_norm(v, alpha, bias):
        mean = v.mean(-1, keepdims=True)
        std = jnp.sqrt(((v - mean) ** 2).sum(-1, keepdims=True) / (v.shape[-1] - 1))
        return alpha * (v - mean) / (std + EPS) + bias

    a1, c1, a2, c2 = ln[0]
    xn = layer_norm(x, a1, c1)
    q = xn @ wq + bq
    k = xn @ wk + bk
    v = xn @ wv + bv
    q = q.reshape(B, S, H, DK).transpose(0, 2, 1, 3)
    k = k.reshape(B, S, H, DK).transpose(0, 2, 1, 3)
    v = v.reshape(B, S, H, DK).transpose(0, 2, 1, 3)
    sc = jnp.einsum("bhqd,bhkd->bhqk", q, k) / math.sqrt(DK)
    sc = jnp.where(mask == 0, -1e9, sc)
    p = jax.nn.softmax(sc, axis=-1)
    o = jnp.einsum("bhqk,bhkd->bhqd", p, v).transpose(0, 2, 1, 3).reshape(B, S, D)
    x1 = x + (o @ wo + bo)
    xn2 = layer_norm(x1, a2, c2)
    ff = jnp.maximum(xn2 @ w1 + b1, 0.0) @ w2 + b2
    return x1 + ff


if __name__ == "__main__":
    key = jax.random.PRNGKey(0)
    ks = jax.random.split(key, 12)

    x = jax.random.normal(ks[0], (B, S, D), jnp.float32)
    # causal mask, broadcast over heads: (B, 1, S, S), 0 = masked position
    mask = jnp.broadcast_to(jnp.tril(jnp.ones((S, S), jnp.float32))[None, None],
                            (B, 1, S, S))

    scale = 0.05
    wq = jax.random.normal(ks[1], (D, D), jnp.float32) * scale
    wk = jax.random.normal(ks[2], (D, D), jnp.float32) * scale
    wv = jax.random.normal(ks[3], (D, D), jnp.float32) * scale
    wo = jax.random.normal(ks[4], (D, D), jnp.float32) * scale
    bq = jax.random.normal(ks[5], (1, D), jnp.float32) * scale
    bk = jax.random.normal(ks[6], (1, D), jnp.float32) * scale
    bv = jax.random.normal(ks[7], (1, D), jnp.float32) * scale
    bo = jax.random.normal(ks[8], (1, D), jnp.float32) * scale
    w1 = jax.random.normal(ks[9], (D, DFF), jnp.float32) * scale
    b1 = jax.random.normal(ks[10], (1, DFF), jnp.float32) * scale
    w2 = jax.random.normal(ks[11], (DFF, D), jnp.float32) * scale
    b2 = jnp.zeros((1, D), jnp.float32)
    # LayerNormalization params (alpha1, bias1, alpha2, bias2) init to ones/zeros
    ln = jnp.array([[1.0, 0.0, 1.0, 0.0]], jnp.float32)

    args = (x, mask, ln, wq, bq, wk, bk, wv, bv, wo, bo, w1, b1, w2, b2)

    out = encoder_block(*args)
    out = jax.block_until_ready(out)

    ref = jax.block_until_ready(reference_forward(*args))
    assert out.shape == (B, S, D)
    assert jnp.allclose(out, ref, atol=1e-2, rtol=1e-2), "mismatch vs JAX reference"

    print("KERNEL_OK")
</pallas_src>

<mosaic_0001>
module attributes {stable_mosaic.version = 11 : i64} {
  func.func @encoder_block_kernel(%arg0: i32, %arg1: memref<16x32xf32, #tpu.memory_space<vmem>>, %arg2: memref<2x8x8xf32, #tpu.memory_space<vmem>>, %arg3: memref<1x4xf32, #tpu.memory_space<smem>>, %arg4: memref<32x96xbf16, #tpu.memory_space<vmem>>, %arg5: memref<32x32xbf16, #tpu.memory_space<vmem>>, %arg6: memref<32x64xbf16, #tpu.memory_space<vmem>>, %arg7: memref<64x32xbf16, #tpu.memory_space<vmem>>, %arg8: memref<4x128xf32, #tpu.memory_space<vmem>>, %arg9: memref<16x32xf32, #tpu.memory_space<vmem>>) attributes {dimension_semantics = [#tpu.dimension_semantics<arbitrary>], iteration_bounds = array<i64: 1>, scalar_prefetch = 0 : i64, scratch_operands = 0 : i64, tpu.core_type = #tpu.core_type<tc>, window_params = [{pipeline_mode = #tpu.pipeline_mode<synchronous>, transform_indices = @transform_0, window_bounds = array<i64: 16, 32>}, {pipeline_mode = #tpu.pipeline_mode<synchronous>, transform_indices = @transform_1, window_bounds = array<i64: 2, 8, 8>}, {transform_indices = @transform_2, window_bounds = array<i64: 1, 4>}, {pipeline_mode = #tpu.pipeline_mode<synchronous>, transform_indices = @transform_3, window_bounds = array<i64: 32, 96>}, {pipeline_mode = #tpu.pipeline_mode<synchronous>, transform_indices = @transform_4, window_bounds = array<i64: 32, 32>}, {pipeline_mode = #tpu.pipeline_mode<synchronous>, transform_indices = @transform_5, window_bounds = array<i64: 32, 64>}, {pipeline_mode = #tpu.pipeline_mode<synchronous>, transform_indices = @transform_6, window_bounds = array<i64: 64, 32>}, {pipeline_mode = #tpu.pipeline_mode<synchronous>, transform_indices = @transform_7, window_bounds = array<i64: 4, 128>}, {pipeline_mode = #tpu.pipeline_mode<synchronous>, transform_indices = @transform_8, window_bounds = array<i64: 16, 32>}]} {
    %c0 = arith.constant 0 : index
    %c0_0 = arith.constant 0 : index
    %0 = vector.load %arg1[%c0, %c0_0] : memref<16x32xf32, #tpu.memory_space<vmem>>, vector<16x32xf32>
    %c0_1 = arith.constant 0 : index
    %c0_2 = arith.constant 0 : index
    %1 = memref.load %arg3[%c0_1, %c0_2] : memref<1x4xf32, #tpu.memory_space<smem>>
    %c0_3 = arith.constant 0 : index
    %c1 = arith.constant 1 : index
    %2 = memref.load %arg3[%c0_3, %c1] : memref<1x4xf32, #tpu.memory_space<smem>>
    %c0_4 = arith.constant 0 : index
    %c2 = arith.constant 2 : index
    %3 = memref.load %arg3[%c0_4, %c2] : memref<1x4xf32, #tpu.memory_space<smem>>
    %c0_5 = arith.constant 0 : index
    %c3 = arith.constant 3 : index
    %4 = memref.load %arg3[%c0_5, %c3] : memref<1x4xf32, #tpu.memory_space<smem>>
    %cst = arith.constant dense<0.000000e+00> : vector<16xf32>
    %5 = vector.multi_reduction <add>, %0, %cst [1] : vector<16x32xf32> to vector<16xf32>
    %6 = vector.shape_cast %5 : vector<16xf32> to vector<16x1xf32>
    %7 = arith.mulf %0, %0 : vector<16x32xf32>
    %cst_6 = arith.constant dense<0.000000e+00> : vector<16xf32>
    %8 = vector.multi_reduction <add>, %7, %cst_6 [1] : vector<16x32xf32> to vector<16xf32>
    %9 = vector.shape_cast %8 : vector<16xf32> to vector<16x1xf32>
    %cst_7 = arith.constant 3.125000e-02 : f32
    %10 = vector.broadcast %cst_7 : f32 to vector<16x1xf32>
    %11 = arith.mulf %6, %10 : vector<16x1xf32>
    %cst_8 = arith.constant 3.200000e+01 : f32
    %12 = vector.broadcast %cst_8 : f32 to vector<16x1xf32>
    %13 = arith.mulf %12, %11 : vector<16x1xf32>
    %14 = arith.mulf %13, %11 : vector<16x1xf32>
    %15 = arith.subf %9, %14 : vector<16x1xf32>
    %cst_9 = arith.constant 0.0322580636 : f32
    %16 = vector.broadcast %cst_9 : f32 to vector<16x1xf32>
    %17 = arith.mulf %15, %16 : vector<16x1xf32>
    %cst_10 = arith.constant 9.99999997E-7 : f32
    %18 = vector.broadcast %cst_10 : f32 to vector<16x1xf32>
    %19 = arith.addf %17, %18 : vector<16x1xf32>
    %20 = math.rsqrt %19 : vector<16x1xf32>
    %21 = vector.broadcast %11 : vector<16x1xf32> to vector<16x32xf32>
    %22 = arith.subf %0, %21 : vector<16x32xf32>
    %23 = vector.broadcast %1 : f32 to vector<16x32xf32>
    %24 = arith.mulf %23, %22 : vector<16x32xf32>
    %25 = vector.broadcast %20 : vector<16x1xf32> to vector<16x32xf32>
    %26 = arith.mulf %24, %25 : vector<16x32xf32>
    %27 = vector.broadcast %2 : f32 to vector<16x32xf32>
    %28 = arith.addf %26, %27 : vector<16x32xf32>
    %29 = arith.truncf %28 : vector<16x32xf32> to vector<16x32xbf16>
    %c0_11 = arith.constant 0 : index
    %c0_12 = arith.constant 0 : index
    %30 = vector.load %arg4[%c0_11, %c0_12] : memref<32x96xbf16, #tpu.memory_space<vmem>>, vector<32x96xbf16>
    %cst_13 = arith.constant dense<0.000000e+00> : vector<16x96xf32>
    %31 = tpu.matmul %29, %30, %cst_13 {dimension_numbers = #tpu.dot_dimension_numbers<[1], [0], [0], [1], [0, 0, 1, 1], [], []>} : vector<16x32xbf16>, vector<32x96xbf16>, vector<16x96xf32> -> vector<16x96xf32>
    %c0_14 = arith.constant 0 : index
    %c0_15 = arith.constant 0 : index
    %32 = vector.load %arg8[%c0_14, %c0_15] : memref<4x128xf32, #tpu.memory_space<vmem>>, vector<1x96xf32>
    %33 = vector.broadcast %32 : vector<1x96xf32> to vector<16x96xf32>
    %34 = arith.addf %31, %33 : vector<16x96xf32>
    %35 = vector.extract_strided_slice %34 {offsets = [0, 0], sizes = [16, 32], strides = [1, 1]} : vector<16x96xf32> to vector<16x32xf32>
    %36 = vector.extract_strided_slice %34 {offsets = [0, 32], sizes = [16, 32], strides = [1, 1]} : vector<16x96xf32> to vector<16x32xf32>
    %37 = vector.extract_strided_slice %34 {offsets = [0, 64], sizes = [16, 32], strides = [1, 1]} : vector<16x96xf32> to vector<16x32xf32>
    %38 = tpu.transpose %36, [1, 0] : vector<16x32xf32> -> vector<32x16xf32>
    %c0_16 = arith.constant 0 : index
    %c0_17 = arith.constant 0 : index
    %c0_18 = arith.constant 0 : index
    %39 = vector.load %arg2[%c0_16, %c0_17, %c0_18] : memref<2x8x8xf32, #tpu.memory_space<vmem>>, vector<1x8x8xf32>
    %40 = vector.shape_cast %39 : vector<1x8x8xf32> to vector<8x8xf32>
    %41 = vector.extract_strided_slice %35 {offsets = [0, 0], sizes = [8, 8], strides = [1, 1]} : vector<16x32xf32> to vector<8x8xf32>
    %42 = arith.truncf %41 : vector<8x8xf32> to vector<8x8xbf16>
    %43 = vector.extract_strided_slice %38 {offsets = [0, 0], sizes = [8, 8], strides = [1, 1]} : vector<32x16xf32> to vector<8x8xf32>
    %44 = arith.truncf %43 : vector<8x8xf32> to vector<8x8xbf16>
    %cst_19 = arith.constant dense<0.000000e+00> : vector<8x8xf32>
    %45 = tpu.matmul %42, %44, %cst_19 {dimension_numbers = #tpu.dot_dimension_numbers<[1], [0], [0], [1], [0, 0, 1, 1], [], []>} : vector<8x8xbf16>, vector<8x8xbf16>, vector<8x8xf32> -> vector<8x8xf32>
    %46 = arith.addf %45, %40 : vector<8x8xf32>
    %47 = vector.extract_strided_slice %35 {offsets = [0, 8], sizes = [8, 8], strides = [1, 1]} : vector<16x32xf32> to vector<8x8xf32>
    %48 = arith.truncf %47 : vector<8x8xf32> to vector<8x8xbf16>
    %49 = vector.extract_strided_slice %38 {offsets = [8, 0], sizes = [8, 8], strides = [1, 1]} : vector<32x16xf32> to vector<8x8xf32>
    %50 = arith.truncf %49 : vector<8x8xf32> to vector<8x8xbf16>
    %cst_20 = arith.constant dense<0.000000e+00> : vector<8x8xf32>
    %51 = tpu.matmul %48, %50, %cst_20 {dimension_numbers = #tpu.dot_dimension_numbers<[1], [0], [0], [1], [0, 0, 1, 1], [], []>} : vector<8x8xbf16>, vector<8x8xbf16>, vector<8x8xf32> -> vector<8x8xf32>
    %52 = arith.addf %51, %40 : vector<8x8xf32>
    %53 = vector.extract_strided_slice %35 {offsets = [0, 16], sizes = [8, 8], strides = [1, 1]} : vector<16x32xf32> to vector<8x8xf32>
    %54 = arith.truncf %53 : vector<8x8xf32> to vector<8x8xbf16>
    %55 = vector.extract_strided_slice %38 {offsets = [16, 0], sizes = [8, 8], strides = [1, 1]} : vector<32x16xf32> to vector<8x8xf32>
    %56 = arith.truncf %55 : vector<8x8xf32> to vector<8x8xbf16>
    %cst_21 = arith.constant dense<0.000000e+00> : vector<8x8xf32>
    %57 = tpu.matmul %54, %56, %cst_21 {dimension_numbers = #tpu.dot_dimension_numbers<[1], [0], [0], [1], [0, 0, 1, 1], [], []>} : vector<8x8xbf16>, vector<8x8xbf16>, vector<8x8xf32> -> vector<8x8xf32>
    %58 = arith.addf %57, %40 : vector<8x8xf32>
    %59 = vector.extract_strided_slice %35 {offsets = [0, 24], sizes = [8, 8], strides = [1, 1]} : vector<16x32xf32> to vector<8x8xf32>
    %60 = arith.truncf %59 : vector<8x8xf32> to vector<8x8xbf16>
    %61 = vector.extract_strided_slice %38 {offsets = [24, 0], sizes = [8, 8], strides = [1, 1]} : vector<32x16xf32> to vector<8x8xf32>
    %62 = arith.truncf %61 : vector<8x8xf32> to vector<8x8xbf16>
    %cst_22 = arith.constant dense<0.000000e+00> : vector<8x8xf32>
    %63 = tpu.matmul %60, %62, %cst_22 {dimension_numbers = #tpu.dot_dimension_numbers<[1], [0], [0], [1], [0, 0, 1, 1], [], []>} : vector<8x8xbf16>, vector<8x8xbf16>, vector<8x8xf32> -> vector<8x8xf32>
    %64 = arith.addf %63, %40 : vector<8x8xf32>
    %c1_23 = arith.constant 1 : index
    %c0_24 = arith.constant 0 : index
    %c0_25 = arith.constant 0 : index
    %65 = vector.load %arg2[%c1_23, %c0_24, %c0_25] : memref<2x8x8xf32, #tpu.memory_space<vmem>>, vector<1x8x8xf32>
    %66 = vector.shape_cast %65 : vector<1x8x8xf32> to vector<8x8xf32>
    %67 = vector.extract_strided_slice %35 {offsets = [8, 0], sizes = [8, 8], strides = [1, 1]} : vector<16x32xf32> to vector<8x8xf32>
    %68 = arith.truncf %67 : vector<8x8xf32> to vector<8x8xbf16>
    %69 = vector.extract_strided_slice %38 {offsets = [0, 8], sizes = [8, 8], strides = [1, 1]} : vector<32x16xf32> to vector<8x8xf32>
    %70 = arith.truncf %69 : vector<8x8xf32> to vector<8x8xbf16>
    %cst_26 = arith.constant dense<0.000000e+00> : vector<8x8xf32>
    %71 = tpu.matmul %68, %70, %cst_26 {dimension_numbers = #tpu.dot_dimension_numbers<[1], [0], [0], [1], [0, 0, 1, 1], [], []>} : vector<8x8xbf16>, vector<8x8xbf16>, vector<8x8xf32> -> vector<8x8xf32>
    %72 = arith.addf %71, %66 : vector<8x8xf32>
    %73 = vector.extract_strided_slice %35 {offsets = [8, 8], sizes = [8, 8], strides = [1, 1]} : vector<16x32xf32> to vector<8x8xf32>
    %74 = arith.truncf %73 : vector<8x8xf32> to vector<8x8xbf16>
    %75 = vector.extract_strided_slice %38 {offsets = [8, 8], sizes = [8, 8], strides = [1, 1]} : vector<32x16xf32> to vector<8x8xf32>
    %76 = arith.truncf %75 : vector<8x8xf32> to vector<8x8xbf16>
    %cst_27 = arith.constant dense<0.000000e+00> : vector<8x8xf32>
    %77 = tpu.matmul %74, %76, %cst_27 {dimension_numbers = #tpu.dot_dimension_numbers<[1], [0], [0], [1], [0, 0, 1, 1], [], []>} : vector<8x8xbf16>, vector<8x8xbf16>, vector<8x8xf32> -> vector<8x8xf32>
    %78 = arith.addf %77, %66 : vector<8x8xf32>
    %79 = vector.extract_strided_slice %35 {offsets = [8, 16], sizes = [8, 8], strides = [1, 1]} : vector<16x32xf32> to vector<8x8xf32>
    %80 = arith.truncf %79 : vector<8x8xf32> to vector<8x8xbf16>
    %81 = vector.extract_strided_slice %38 {offsets = [16, 8], sizes = [8, 8], strides = [1, 1]} : vector<32x16xf32> to vector<8x8xf32>
    %82 = arith.truncf %81 : vector<8x8xf32> to vector<8x8xbf16>
    %cst_28 = arith.constant dense<0.000000e+00> : vector<8x8xf32>
    %83 = tpu.matmul %80, %82, %cst_28 {dimension_numbers = #tpu.dot_dimension_numbers<[1], [0], [0], [1], [0, 0, 1, 1], [], []>} : vector<8x8xbf16>, vector<8x8xbf16>, vector<8x8xf32> -> vector<8x8xf32>
    %84 = arith.addf %83, %66 : vector<8x8xf32>
    %85 = vector.extract_strided_slice %35 {offsets = [8, 24], sizes = [8, 8], strides = [1, 1]} : vector<16x32xf32> to vector<8x8xf32>
    %86 = arith.truncf %85 : vector<8x8xf32> to vector<8x8xbf16>
    %87 = vector.extract_strided_slice %38 {offsets = [24, 8], sizes = [8, 8], strides = [1, 1]} : vector<32x16xf32> to vector<8x8xf32>
    %88 = arith.truncf %87 : vector<8x8xf32> to vector<8x8xbf16>
    %cst_29 = arith.constant dense<0.000000e+00> : vector<8x8xf32>
    %89 = tpu.matmul %86, %88, %cst_29 {dimension_numbers = #tpu.dot_dimension_numbers<[1], [0], [0], [1], [0, 0, 1, 1], [], []>} : vector<8x8xbf16>, vector<8x8xbf16>, vector<8x8xf32> -> vector<8x8xf32>
    %90 = arith.addf %89, %66 : vector<8x8xf32>
    %91 = tpu.concatenate %46, %52, %58, %64, %72, %78, %84, %90 in 0 : vector<8x8xf32>, vector<8x8xf32>, vector<8x8xf32>, vector<8x8xf32>, vector<8x8xf32>, vector<8x8xf32>, vector<8x8xf32>, vector<8x8xf32> -> vector<64x8xf32>
    %cst_30 = arith.constant dense<0xFF800000> : vector<64xf32>
    %92 = vector.multi_reduction <maximumf>, %91, %cst_30 [1] : vector<64x8xf32> to vector<64xf32>
    %93 = vector.shape_cast %92 : vector<64xf32> to vector<64x1xf32>
    %94 = vector.broadcast %93 : vector<64x1xf32> to vector<64x8xf32>
    %95 = arith.subf %91, %94 : vector<64x8xf32>
    %96 = math.exp %95 : vector<64x8xf32>
    %cst_31 = arith.constant dense<0.000000e+00> : vector<64xf32>
    %97 = vector.multi_reduction <add>, %96, %cst_31 [1] : vector<64x8xf32> to vector<64xf32>
    %98 = vector.shape_cast %97 : vector<64xf32> to vector<64x1xf32>
    %99 = tpu.reciprocal %98 {approx = true} : vector<64x1xf32> -> vector<64x1xf32>
    %100 = vector.broadcast %99 : vector<64x1xf32> to vector<64x8xf32>
    %101 = arith.mulf %96, %100 : vector<64x8xf32>
    %102 = vector.extract_strided_slice %101 {offsets = [0, 0], sizes = [8, 8], strides = [1, 1]} : vector<64x8xf32> to vector<8x8xf32>
    %103 = arith.truncf %102 : vector<8x8xf32> to vector<8x8xbf16>
    %104 = vector.extract_strided_slice %37 {offsets = [0, 0], sizes = [8, 8], strides = [1, 1]} : vector<16x32xf32> to vector<8x8xf32>
    %105 = arith.truncf %104 : vector<8x8xf32> to vector<8x8xbf16>
    %cst_32 = arith.constant dense<0.000000e+00> : vector<8x8xf32>
    %106 = tpu.matmul %103, %105, %cst_32 {dimension_numbers = #tpu.dot_dimension_numbers<[1], [0], [0], [1], [0, 0, 1, 1], [], []>} : vector<8x8xbf16>, vector<8x8xbf16>, vector<8x8xf32> -> vector<8x8xf32>
    %107 = vector.extract_strided_slice %101 {offsets = [32, 0], sizes = [8, 8], strides = [1, 1]} : vector<64x8xf32> to vector<8x8xf32>
    %108 = arith.truncf %107 : vector<8x8xf32> to vector<8x8xbf16>
    %109 = vector.extract_strided_slice %37 {offsets = [8, 0], sizes = [8, 8], strides = [1, 1]} : vector<16x32xf32> to vector<8x8xf32>
    %110 = arith.truncf %109 : vector<8x8xf32> to vector<8x8xbf16>
    %cst_33 = arith.constant dense<0.000000e+00> : vector<8x8xf32>
    %111 = tpu.matmul %108, %110, %cst_33 {dimension_numbers = #tpu.dot_dimension_numbers<[1], [0], [0], [1], [0, 0, 1, 1], [], []>} : vector<8x8xbf16>, vector<8x8xbf16>, vector<8x8xf32> -> vector<8x8xf32>
    %112 = tpu.concatenate %106, %111 in 0 : vector<8x8xf32>, vector<8x8xf32> -> vector<16x8xf32>
    %113 = vector.extract_strided_slice %101 {offsets = [8, 0], sizes = [8, 8], strides = [1, 1]} : vector<64x8xf32> to vector<8x8xf32>
    %114 = arith.truncf %113 : vector<8x8xf32> to vector<8x8xbf16>
    %115 = vector.extract_strided_slice %37 {offsets = [0, 8], sizes = [8, 8], strides = [1, 1]} : vector<16x32xf32> to vector<8x8xf32>
    %116 = arith.truncf %115 : vector<8x8xf32> to vector<8x8xbf16>
    %cst_34 = arith.constant dense<0.000000e+00> : vector<8x8xf32>
    %117 = tpu.matmul %114, %116, %cst_34 {dimension_numbers = #tpu.dot_dimension_numbers<[1], [0], [0], [1], [0, 0, 1, 1], [], []>} : vector<8x8xbf16>, vector<8x8xbf16>, vector<8x8xf32> -> vector<8x8xf32>
    %118 = vector.extract_strided_slice %101 {offsets = [40, 0], sizes = [8, 8], strides = [1, 1]} : vector<64x8xf32> to vector<8x8xf32>
    %119 = arith.truncf %118 : vector<8x8xf32> to vector<8x8xbf16>
    %120 = vector.extract_strided_slice %37 {offsets = [8, 8], sizes = [8, 8], strides = [1, 1]} : vector<16x32xf32> to vector<8x8xf32>
    %121 = arith.truncf %120 : vector<8x8xf32> to vector<8x8xbf16>
    %cst_35 = arith.constant dense<0.000000e+00> : vector<8x8xf32>
    %122 = tpu.matmul %119, %121, %cst_35 {dimension_numbers = #tpu.dot_dimension_numbers<[1], [0], [0], [1], [0, 0, 1, 1], [], []>} : vector<8x8xbf16>, vector<8x8xbf16>, vector<8x8xf32> -> vector<8x8xf32>
    %123 = tpu.concatenate %117, %122 in 0 : vector<8x8xf32>, vector<8x8xf32> -> vector<16x8xf32>
    %124 = vector.extract_strided_slice %101 {offsets = [16, 0], sizes = [8, 8], strides = [1, 1]} : vector<64x8xf32> to vector<8x8xf32>
    %125 = arith.truncf %124 : vector<8x8xf32> to vector<8x8xbf16>
    %126 = vector.extract_strided_slice %37 {offsets = [0, 16], sizes = [8, 8], strides = [1, 1]} : vector<16x32xf32> to vector<8x8xf32>
    %127 = arith.truncf %126 : vector<8x8xf32> to vector<8x8xbf16>
    %cst_36 = arith.constant dense<0.000000e+00> : vector<8x8xf32>
    %128 = tpu.matmul %125, %127, %cst_36 {dimension_numbers = #tpu.dot_dimension_numbers<[1], [0], [0], [1], [0, 0, 1, 1], [], []>} : vector<8x8xbf16>, vector<8x8xbf16>, vector<8x8xf32> -> vector<8x8xf32>
    %129 = vector.extract_strided_slice %101 {offsets = [48, 0], sizes = [8, 8], strides = [1, 1]} : vector<64x8xf32> to vector<8x8xf32>
    %130 = arith.truncf %129 : vector<8x8xf32> to vector<8x8xbf16>
    %131 = vector.extract_strided_slice %37 {offsets = [8, 16], sizes = [8, 8], strides = [1, 1]} : vector<16x32xf32> to vector<8x8xf32>
    %132 = arith.truncf %131 : vector<8x8xf32> to vector<8x8xbf16>
    %cst_37 = arith.constant dense<0.000000e+00> : vector<8x8xf32>
    %133 = tpu.matmul %130, %132, %cst_37 {dimension_numbers = #tpu.dot_dimension_numbers<[1], [0], [0], [1], [0, 0, 1, 1], [], []>} : vector<8x8xbf16>, vector<8x8xbf16>, vector<8x8xf32> -> vector<8x8xf32>
    %134 = tpu.concatenate %128, %133 in 0 : vector<8x8xf32>, vector<8x8xf32> -> vector<16x8xf32>
    %135 = vector.extract_strided_slice %101 {offsets = [24, 0], sizes = [8, 8], strides = [1, 1]} : vector<64x8xf32> to vector<8x8xf32>
    %136 = arith.truncf %135 : vector<8x8xf32> to vector<8x8xbf16>
    %137 = vector.extract_strided_slice %37 {offsets = [0, 24], sizes = [8, 8], strides = [1, 1]} : vector<16x32xf32> to vector<8x8xf32>
    %138 = arith.truncf %137 : vector<8x8xf32> to vector<8x8xbf16>
    %cst_38 = arith.constant dense<0.000000e+00> : vector<8x8xf32>
    %139 = tpu.matmul %136, %138, %cst_38 {dimension_numbers = #tpu.dot_dimension_numbers<[1], [0], [0], [1], [0, 0, 1, 1], [], []>} : vector<8x8xbf16>, vector<8x8xbf16>, vector<8x8xf32> -> vector<8x8xf32>
    %140 = vector.extract_strided_slice %101 {offsets = [56, 0], sizes = [8, 8], strides = [1, 1]} : vector<64x8xf32> to vector<8x8xf32>
    %141 = arith.truncf %140 : vector<8x8xf32> to vector<8x8xbf16>
    %142 = vector.extract_strided_slice %37 {offsets = [8, 24], sizes = [8, 8], strides = [1, 1]} : vector<16x32xf32> to vector<8x8xf32>
    %143 = arith.truncf %142 : vector<8x8xf32> to vector<8x8xbf16>
    %cst_39 = arith.constant dense<0.000000e+00> : vector<8x8xf32>
    %144 = tpu.matmul %141, %143, %cst_39 {dimension_numbers = #tpu.dot_dimension_numbers<[1], [0], [0], [1], [0, 0, 1, 1], [], []>} : vector<8x8xbf16>, vector<8x8xbf16>, vector<8x8xf32> -> vector<8x8xf32>
    %145 = tpu.concatenate %139, %144 in 0 : vector<8x8xf32>, vector<8x8xf32> -> vector<16x8xf32>
    %146 = tpu.concatenate %112, %123, %134, %145 in 1 : vector<16x8xf32>, vector<16x8xf32>, vector<16x8xf32>, vector<16x8xf32> -> vector<16x32xf32>
    %147 = arith.truncf %146 : vector<16x32xf32> to vector<16x32xbf16>
    %c0_40 = arith.constant 0 : index
    %c0_41 = arith.constant 0 : index
    %148 = vector.load %arg5[%c0_40, %c0_41] : memref<32x32xbf16, #tpu.memory_space<vmem>>, vector<32x32xbf16>
    %cst_42 = arith.constant dense<0.000000e+00> : vector<16x32xf32>
    %149 = tpu.matmul %147, %148, %cst_42 {dimension_numbers = #tpu.dot_dimension_numbers<[1], [0], [0], [1], [0, 0, 1, 1], [], []>} : vector<16x32xbf16>, vector<32x32xbf16>, vector<16x32xf32> -> vector<16x32xf32>
    %150 = arith.addf %0, %149 : vector<16x32xf32>
    %c1_43 = arith.constant 1 : index
    %c0_44 = arith.constant 0 : index
    %151 = vector.load %arg8[%c1_43, %c0_44] : memref<4x128xf32, #tpu.memory_space<vmem>>, vector<1x32xf32>
    %152 = vector.broadcast %151 : vector<1x32xf32> to vector<16x32xf32>
    %153 = arith.addf %150, %152 : vector<16x32xf32>
    %cst_45 = arith.constant dense<0.000000e+00> : vector<16xf32>
    %154 = vector.multi_reduction <add>, %153, %cst_45 [1] : vector<16x32xf32> to vector<16xf32>
    %155 = vector.shape_cast %154 : vector<16xf32> to vector<16x1xf32>
    %156 = arith.mulf %153, %153 : vector<16x32xf32>
    %cst_46 = arith.constant dense<0.000000e+00> : vector<16xf32>
    %157 = vector.multi_reduction <add>, %156, %cst_46 [1] : vector<16x32xf32> to vector<16xf32>
    %158 = vector.shape_cast %157 : vector<16xf32> to vector<16x1xf32>
    %cst_47 = arith.constant 3.125000e-02 : f32
    %159 = vector.broadcast %cst_47 : f32 to vector<16x1xf32>
    %160 = arith.mulf %155, %159 : vector<16x1xf32>
    %cst_48 = arith.constant 3.200000e+01 : f32
    %161 = vector.broadcast %cst_48 : f32 to vector<16x1xf32>
    %162 = arith.mulf %161, %160 : vector<16x1xf32>
    %163 = arith.mulf %162, %160 : vector<16x1xf32>
    %164 = arith.subf %158, %163 : vector<16x1xf32>
    %cst_49 = arith.constant 0.0322580636 : f32
    %165 = vector.broadcast %cst_49 : f32 to vector<16x1xf32>
    %166 = arith.mulf %164, %165 : vector<16x1xf32>
    %cst_50 = arith.constant 9.99999997E-7 : f32
    %167 = vector.broadcast %cst_50 : f32 to vector<16x1xf32>
    %168 = arith.addf %166, %167 : vector<16x1xf32>
    %169 = math.rsqrt %168 : vector<16x1xf32>
    %170 = vector.broadcast %160 : vector<16x1xf32> to vector<16x32xf32>
    %171 = arith.subf %153, %170 : vector<16x32xf32>
    %172 = vector.broadcast %3 : f32 to vector<16x32xf32>
    %173 = arith.mulf %172, %171 : vector<16x32xf32>
    %174 = vector.broadcast %169 : vector<16x1xf32> to vector<16x32xf32>
    %175 = arith.mulf %173, %174 : vector<16x32xf32>
    %176 = vector.broadcast %4 : f32 to vector<16x32xf32>
    %177 = arith.addf %175, %176 : vector<16x32xf32>
    %178 = arith.truncf %177 : vector<16x32xf32> to vector<16x32xbf16>
    %c0_51 = arith.constant 0 : index
    %c0_52 = arith.constant 0 : index
    %179 = vector.load %arg6[%c0_51, %c0_52] : memref<32x64xbf16, #tpu.memory_space<vmem>>, vector<32x64xbf16>
    %cst_53 = arith.constant dense<0.000000e+00> : vector<16x64xf32>
    %180 = tpu.matmul %178, %179, %cst_53 {dimension_numbers = #tpu.dot_dimension_numbers<[1], [0], [0], [1], [0, 0, 1, 1], [], []>} : vector<16x32xbf16>, vector<32x64xbf16>, vector<16x64xf32> -> vector<16x64xf32>
    %c2_54 = arith.constant 2 : index
    %c0_55 = arith.constant 0 : index
    %181 = vector.load %arg8[%c2_54, %c0_55] : memref<4x128xf32, #tpu.memory_space<vmem>>, vector<1x64xf32>
    %182 = vector.broadcast %181 : vector<1x64xf32> to vector<16x64xf32>
    %183 = arith.addf %180, %182 : vector<16x64xf32>
    %cst_56 = arith.constant 0.000000e+00 : f32
    %184 = vector.broadcast %cst_56 : f32 to vector<16x64xf32>
    %185 = arith.maximumf %183, %184 : vector<16x64xf32>
    %186 = arith.truncf %185 : vector<16x64xf32> to vector<16x64xbf16>
    %c0_57 = arith.constant 0 : index
    %c0_58 = arith.constant 0 : index
    %187 = vector.load %arg7[%c0_57, %c0_58] : memref<64x32xbf16, #tpu.memory_space<vmem>>, vector<64x32xbf16>
    %cst_59 = arith.constant dense<0.000000e+00> : vector<16x32xf32>
    %188 = tpu.matmul %186, %187, %cst_59 {dimension_numbers = #tpu.dot_dimension_numbers<[1], [0], [0], [1], [0, 0, 1, 1], [], []>} : vector<16x64xbf16>, vector<64x32xbf16>, vector<16x32xf32> -> vector<16x32xf32>
    %c3_60 = arith.constant 3 : index
    %c0_61 = arith.constant 0 : index
    %189 = vector.load %arg8[%c3_60, %c0_61] : memref<4x128xf32, #tpu.memory_space<vmem>>, vector<1x32xf32>
    %190 = vector.broadcast %189 : vector<1x32xf32> to vector<16x32xf32>
    %191 = arith.addf %188, %190 : vector<16x32xf32>
    %192 = arith.addf %153, %191 : vector<16x32xf32>
    %c0_62 = arith.constant 0 : index
    %c0_63 = arith.constant 0 : index
    %193 = vector.load %arg9[%c0_62, %c0_63] : memref<16x32xf32, #tpu.memory_space<vmem>>, vector<16x32xf32>
    tpu.vector_store %arg9[%c0_62, %c0_63], %192 {strides = array<i32>} : memref<16x32xf32, #tpu.memory_space<vmem>>, vector<16x32xf32>,
    return
  }
  func.func @transform_0(%arg0: i32) -> (i32, i32) {
    %c0_i32 = arith.constant 0 : i32
    %c0_i32_0 = arith.constant 0 : i32
    %c0_i32_1 = arith.constant 0 : i32
    return %c0_i32, %c0_i32_0 : i32, i32
  }
  func.func @transform_1(%arg0: i32) -> (i32, i32, i32) {
    %c0_i32 = arith.constant 0 : i32
    %c0_i32_0 = arith.constant 0 : i32
    %c0_i32_1 = arith.constant 0 : i32
    %c0_i32_2 = arith.constant 0 : i32
    return %c0_i32, %c0_i32_0, %c0_i32_1 : i32, i32, i32
  }
  func.func @transform_2(%arg0: i32) -> (i32, i32) {
    %c0_i32 = arith.constant 0 : i32
    %c0_i32_0 = arith.constant 0 : i32
    %c0_i32_1 = arith.constant 0 : i32
    return %c0_i32, %c0_i32_0 : i32, i32
  }
  func.func @transform_3(%arg0: i32) -> (i32, i32) {
    %c0_i32 = arith.constant 0 : i32
    %c0_i32_0 = arith.constant 0 : i32
    %c0_i32_1 = arith.constant 0 : i32
    return %c0_i32, %c0_i32_0 : i32, i32
  }
  func.func @transform_4(%arg0: i32) -> (i32, i32) {
    %c0_i32 = arith.constant 0 : i32
    %c0_i32_0 = arith.constant 0 : i32
    %c0_i32_1 = arith.constant 0 : i32
    return %c0_i32, %c0_i32_0 : i32, i32
  }
  func.func @transform_5(%arg0: i32) -> (i32, i32) {
    %c0_i32 = arith.constant 0 : i32
    %c0_i32_0 = arith.constant 0 : i32
    %c0_i32_1 = arith.constant 0 : i32
    return %c0_i32, %c0_i32_0 : i32, i32
  }
  func.func @transform_6(%arg0: i32) -> (i32, i32) {
    %c0_i32 = arith.constant 0 : i32
    %c0_i32_0 = arith.constant 0 : i32
    %c0_i32_1 = arith.constant 0 : i32
    return %c0_i32, %c0_i32_0 : i32, i32
  }
  func.func @transform_7(%arg0: i32) -> (i32, i32) {
    %c0_i32 = arith.constant 0 : i32
    %c0_i32_0 = arith.constant 0 : i32
    %c0_i32_1 = arith.constant 0 : i32
    return %c0_i32, %c0_i32_0 : i32, i32
  }
  func.func @transform_8(%arg0: i32) -> (i32, i32) {
    %c0_i32 = arith.constant 0 : i32
    %c0_i32_0 = arith.constant 0 : i32
    %c0_i32_1 = arith.constant 0 : i32
    return %c0_i32, %c0_i32_0 : i32, i32
  }
}

</mosaic_0001>

<llo_original>
// kernel: tpu_custom_call.1
$region0: #{tpu_custom_call.1}
  #allocation0 [shape = 'u32[]', space=smem, size = 0x4, offset = 0x4, fixed_abs, tag = 'smem constant byte address 0x4 - core index']
  #allocation1 [shape = 'u32[144,128]{1,0:T(1,128)}', space=vmem, size = 0x12000, scoped, tag = 'internal scratch']
  %s0 = inlined_call_operand.vmem [shape: f32[16,32], index: 0, kind: input, shape index: {}]
  %s1 = inlined_call_operand.vmem [shape: f32[2,8,8], index: 1, kind: input, shape index: {}]
  %s2 = inlined_call_operand.vmem [shape: f32[1,4], index: 2, kind: input, shape index: {}]
  %s3 = inlined_call_operand.vmem [shape: bf16[32,96], index: 3, kind: input, shape index: {}]
  %s4 = inlined_call_operand.hbm [shape: bf16[32,32], index: 4, kind: input, shape index: {}]
  %s5 = inlined_call_operand.hbm [shape: bf16[32,64], index: 5, kind: input, shape index: {}]
  %s6 = inlined_call_operand.vmem [shape: bf16[64,32], index: 6, kind: input, shape index: {}]
  %s7 = inlined_call_operand.vmem [shape: f32[4,128], index: 7, kind: input, shape index: {}]
  %s8 = inlined_call_operand.hbm [shape: f32[16,32], index: 8, kind: output, shape index: {}]
  %s9 = sld [smem:[#allocation0]]
  $region54: #{tpu_custom_call.1} parent=0
    _
  %s11 = ssub.s32 1, %s9
  %s12 = scalar_select 0, %s11, %s9
  $region1: #{tpu_custom_call.1} parent=0
    #allocation2 [shape = 'u8[512]{0}', space=smem, size = 0x200, scoped, tag = 'input window, operand 2, single buffered']
    #allocation3 [shape = 's32[1]{0}', space=sflag, size = 0x4, scoped, tag = 'scoped memory for tpu_custom_call.1']
    #allocation4 [shape = 's32[1]{0}', space=sflag, size = 0x4, scoped, tag = 'scoped memory for tpu_custom_call.1']
    #allocation5 [shape = 's32[1]{0}', space=sflag, size = 0x4, scoped, tag = 'scoped memory for tpu_custom_call.1']
    #allocation6 [shape = 'u8[8192]{0}', space=vmem, size = 0x2000, scoped, tag = 'input window, operand 4, single buffered']
    #allocation7 [shape = 'u8[8192]{0}', space=vmem, size = 0x2000, scoped, tag = 'input window, operand 5, single buffered']
    #allocation8 [shape = 's32[1]{0}', space=sflag, size = 0x4, scoped, tag = 'scoped memory for tpu_custom_call.1']
    #allocation9 [shape = 'u8[8192]{0}', space=vmem, size = 0x2000, scoped, tag = 'output window, operand 0, single buffered']
    %13 = vsyncpa [#allocation5], 0
    %14 = vsyncpa [#allocation3], 0
    %15 = vsyncpa [#allocation8], 0
    %16 = vsyncpa [#allocation4], 0
    // Predicated region
    $region2: #{tpu_custom_call.1} parent=1 // pred_check
      _
    $region3: #{tpu_custom_call.1} parent=1 // pred_check_branch
      %18 = sbr.rel (0) target = $region5
    $region4: #{tpu_custom_call.1} parent=1 // pred_region
      _
    $region5: #{tpu_custom_call.1} parent=1 // pred_fallthru
      _
    // Predicated region
    $region6: #{tpu_custom_call.1} parent=1 // pred_check
      _
    $region7: #{tpu_custom_call.1} parent=1 // pred_check_branch
      %20 = sbr.rel (0) target = $region9
    $region8: #{tpu_custom_call.1} parent=1 // pred_region
      _
    $region9: #{tpu_custom_call.1} parent=1 // pred_fallthru
      _
    // Predicated region
    $region10: #{tpu_custom_call.1} parent=1 // pred_check
      _
    $region11: #{tpu_custom_call.1} parent=1 // pred_check_branch
      %22 = sbr.rel (0) target = $region13
    $region12: #{tpu_custom_call.1} parent=1 // pred_region
      %s24 = ssub.s32 16, 16
      %25 = vsyncadd [#allocation5], %s24
      %s27 = sshll.u32 %s2, 4
      %s28 = int_to_ptr.vmem [resolvable:$true] %s27
      %30 = dma.vmem_to_smem %s28, 16, [#allocation2], [#allocation5]
    $region13: #{tpu_custom_call.1} parent=1 // pred_fallthru
      _
    // Predicated region
    $region14: #{tpu_custom_call.1} parent=1 // pred_check
      _
    $region15: #{tpu_custom_call.1} parent=1 // pred_check_branch
      %32 = sbr.rel (0) target = $region17
    $region16: #{tpu_custom_call.1} parent=1 // pred_region
      _
    $region17: #{tpu_custom_call.1} parent=1 // pred_fallthru
      _
    // Predicated region
    $region18: #{tpu_custom_call.1} parent=1 // pred_check
      _
    $region19: #{tpu_custom_call.1} parent=1 // pred_check_branch
      %34 = sbr.rel (0) target = $region21
    $region20: #{tpu_custom_call.1} parent=1 // pred_region
      %s36 = ssub.s32 256, 256
      %37 = vsyncadd [#allocation3], %s36
      %s38 = sshll.u32 [#allocation6], 4
      %s39 = int_to_ptr.vmem [resolvable:$true] %s38
      %44 = dma.hbm_to_vmem [thread:$0]  %s4, 256, %s39, [#allocation3], 64, 64, 4
    $region21: #{tpu_custom_call.1} parent=1 // pred_fallthru
      _
    // Predicated region
    $region22: #{tpu_custom_call.1} parent=1 // pred_check
      _
    $region23: #{tpu_custom_call.1} parent=1 // pred_check_branch
      %46 = sbr.rel (0) target = $region25
    $region24: #{tpu_custom_call.1} parent=1 // pred_region
      %s48 = ssub.s32 256, 256
      %49 = vsyncadd [#allocation8], %s48
      %s50 = sshll.u32 [#allocation7], 4
      %s51 = int_to_ptr.vmem [resolvable:$true] %s50
      %56 = dma.hbm_to_vmem [thread:$0]  %s5, 256, %s51, [#allocation8], 64, 64, 4
    $region25: #{tpu_custom_call.1} parent=1 // pred_fallthru
      _
    // Predicated region
    $region26: #{tpu_custom_call.1} parent=1 // pred_check
      _
    $region27: #{tpu_custom_call.1} parent=1 // pred_check_branch
      %58 = sbr.rel (0) target = $region29
    $region28: #{tpu_custom_call.1} parent=1 // pred_region
      _
    $region29: #{tpu_custom_call.1} parent=1 // pred_fallthru
      _
    // Predicated region
    $region30: #{tpu_custom_call.1} parent=1 // pred_check
      _
    $region31: #{tpu_custom_call.1} parent=1 // pred_check_branch
      %60 = sbr.rel (0) target = $region33
    $region32: #{tpu_custom_call.1} parent=1 // pred_region
      _
    $region33: #{tpu_custom_call.1} parent=1 // pred_fallthru
      _
    // Predicated region
    $region34: #{tpu_custom_call.1} parent=1 // pred_check
      _
    $region35: #{tpu_custom_call.1} parent=1 // pred_check_branch
      %62 = sbr.rel (0) target = $region37
    $region36: #{tpu_custom_call.1} parent=1 // pred_region
      %63 = dma.done [#allocation5], 16
    $region37: #{tpu_custom_call.1} parent=1 // pred_fallthru
      _
    // Predicated region
    $region38: #{tpu_custom_call.1} parent=1 // pred_check
      _
    $region39: #{tpu_custom_call.1} parent=1 // pred_check_branch
      %65 = sbr.rel (0) target = $region41
    $region40: #{tpu_custom_call.1} parent=1 // pred_region
      %66 = dma.done [#allocation3], 256
    $region41: #{tpu_custom_call.1} parent=1 // pred_fallthru
      _
    // Predicated region
    $region42: #{tpu_custom_call.1} parent=1 // pred_check
      _
    $region43: #{tpu_custom_call.1} parent=1 // pred_check_branch
      %68 = sbr.rel (0) target = $region45
    $region44: #{tpu_custom_call.1} parent=1 // pred_region
      %69 = dma.done [#allocation8], 256
    $region45: #{tpu_custom_call.1} parent=1 // pred_fallthru
      _
    %70 = sfence
    %v72 = vld [vmem:[%s0] sm:$0xff]
    %v73 = vld [vmem:[%s0 + $0x8] sm:$0xff]
    %s74 = sld [smem:[#allocation2]]
    %s75 = sld [smem:[#allocation2 + $0x1]]
    %s76 = sld [smem:[#allocation2 + $0x2]]
    %s77 = sld [smem:[#allocation2 + $0x3]]
    %vm78 = vcmask 261120
    %v79 = vsel %vm78, %v72, 0.0
    %80 = vadd.xlane.f32.xlu0 %v79
    %v81 = vpop.xlane.xlu0 %80
    %v82 = vsel %vm78, %v73, 0.0
    %83 = vadd.xlane.f32.xlu0 %v82
    %v84 = vpop.xlane.xlu0 %83
    %v85 = vmul.f32 %v72, %v72
    %v86 = vmul.f32 %v73, %v73
    %v87 = vsel %vm78, %v85, 0.0
    %88 = vadd.xlane.f32.xlu0 %v87
    %v89 = vpop.xlane.xlu0 %88
    %v90 = vsel %vm78, %v86, 0.0
    %91 = vadd.xlane.f32.xlu0 %v90
    %v92 = vpop.xlane.xlu0 %91
    %v93 = vmul.f32 %v81, 0.03125
    %v94 = vmul.f32 %v84, 0.03125
    %v95 = vmul.f32 %v93, 32.0
    %v96 = vmul.f32 %v94, 32.0
    %v97 = vmul.f32 %v95, %v93
    %v98 = vmul.f32 %v96, %v94
    %v99 = vsub.f32 %v89, %v97
    %v100 = vsub.f32 %v92, %v98
    %v101 = vmul.f32 %v99, 0.032258064
    %v102 = vmul.f32 %v100, 0.032258064
    %v103 = vadd.f32 %v101, 1e-06
    %v104 = vadd.f32 %v102, 1e-06
    %v105 = vrsqrt.pop %v103
    %v106 = vrsqrt.pop %v104
    %v107 = vsub.f32 %v72, %v93
    %v108 = vsub.f32 %v73, %v94
    %v109 = vstv %s74
    %v110 = vmul.f32 %v109, %v107
    %v111 = vmul.f32 %v109, %v108
    %v112 = vmul.f32 %v110, %v105
    %v113 = vmul.f32 %v111, %v106
    %v114 = vstv %s75
    %v115 = vadd.f32 %v112, %v114
    %v116 = vadd.f32 %v113, %v114
    %v117 = vpack.c.bf16 %v116, %v115
    %v118 = vld [vmem:[%s3] sm:$0xf]
    %v119 = vld [vmem:[%s3 + $0x4] sm:$0xf]
    %v120 = vld [vmem:[%s3 + $0x8] sm:$0xf]
    %v121 = vld [vmem:[%s3 + $0xc] sm:$0xf]
    %v122 = vld [vmem:[%s7] sm:$0x1]
    %v123 = vlaneseq
    %v124 = vshrl.u32 %v123, 7
    %v125 = vsub.s32 0, %v124
    %v126 = vrot.slane %v122, %v125
    %v131 = vunpack.c.l.b16 %v118
    %v132 = vunpack.c.l.b16 %v119
    %v133 = vunpack.c.l.b16 %v120
    %v134 = vunpack.c.l.b16 %v121
    %v135 = vpack.c.b16 %v132, %v131
    %v136 = vpack.c.b16 %v134, %v133
    %v140 = vsel %vm78, %v117, 0
    %142 = vmatprep.subr.bf16.mxu0 0
    %143 = vmatpush1.bf16.msra.mxu0 %v135
    %144 = vmatprep.subr.bf16.mxu0 0
    %145 = vmatpush1.bf16.msra.mxu0 %v136
    %146 = vmatprep.subr.bf16.mxu0 0
    %147 = vmatpush1.bf16.msra.mxu0 0
    %148 = vmatprep.subr.bf16.mxu0 0
    %149 = vmatpush1.bf16.msra.mxu0 0
    %150 = vmatprep.subr.bf16.mxu0 0
    %151 = vmatpush1.bf16.msra.mxu0 0
    %152 = vmatprep.subr.bf16.mxu0 0
    %153 = vmatpush1.bf16.msra.mxu0 0
    %154 = vmatprep.subr.bf16.mxu0 0
    %155 = vmatpush1.bf16.msra.mxu0 0
    %156 = vmatprep.subr.bf16.mxu0 0
    %157 = vmatpush1.bf16.msra.mxu0 0
    %158 = vmatprep.subr.bf16.mxu0 0
    %159 = vmatpush1.bf16.msra.mxu0 0
    %160 = vmatprep.subr.bf16.mxu0 0
    %161 = vmatpush1.bf16.msra.mxu0 0
    %162 = vmatprep.subr.bf16.mxu0 0
    %163 = vmatpush1.bf16.msra.mxu0 0
    %164 = vmatprep.subr.bf16.mxu0 0
    %165 = vmatpush1.bf16.msra.mxu0 0
    %166 = vmatprep.subr.bf16.mxu0 0
    %167 = vmatpush1.bf16.msra.mxu0 0
    %168 = vmatprep.subr.bf16.mxu0 0
    %169 = vmatpush1.bf16.msra.mxu0 0
    %170 = vmatprep.subr.bf16.mxu0 0
    %171 = vmatpush1.bf16.msra.mxu0 0
    %172 = vmatprep.subr.bf16.mxu0 0
    %173 = vmatpush1.bf16.msra.mxu0 0
    %174 = vmatprep.mubr.bf16.mxu0 0
    %175 = vmatmul.mubr.bf16.gmra.mrb[0].mxu0 %v140
    %v176 = vpop.f32.mrb[0].mxu0
    %v177 = vadd.f32 %v126, %v176
    %v178 = vpop.f32.mrb[0].mxu0
    %v179 = vpop.f32.mrb[0].mxu0
    %v180 = vadd.f32 %v126, %v179
    %v181 = vpop.f32.mrb[0].mxu0
    %182 = vdwg.mxu0
    %185 = vrot.lane.b32.xlu0 %v177, 96
    %v186 = vpop.permute.xlu0 %185
    %187 = vrot.lane.b32.xlu0 %v180, 96
    %v188 = vpop.permute.xlu0 %187
    %191 = vxpose.xlu0.b32.start [1/16] %v186, 128
    %192 = vxpose.xlu0.b32.cont [2/16] %v188, 128
    %193 = vxpose.xlu0.b32.cont [3/16] 0.0, 128
    %194 = vxpose.xlu0.b32.cont [4/16] 0.0, 128
    %195 = vxpose.xlu0.b32.cont [5/16] 0.0, 128
    %196 = vxpose.xlu0.b32.cont [6/16] 0.0, 128
    %197 = vxpose.xlu0.b32.cont [7/16] 0.0, 128
    %198 = vxpose.xlu0.b32.cont [8/16] 0.0, 128
    %199 = vxpose.xlu0.b32.cont [9/16] 0.0, 128
    %200 = vxpose.xlu0.b32.cont [10/16] 0.0, 128
    %201 = vxpose.xlu0.b32.cont [11/16] 0.0, 128
    %202 = vxpose.xlu0.b32.cont [12/16] 0.0, 128
    %203 = vxpose.xlu0.b32.cont [13/16] 0.0, 128
    %204 = vxpose.xlu0.b32.cont [14/16] 0.0, 128
    %205 = vxpose.xlu0.b32.cont [15/16] 0.0, 128
    %206 = vxpose.xlu0.b32.end [16/16] 0.0, 128
    %v207 = vpop.trf.xlu0
    %v208 = vpop.trf.xlu0
    %v209 = vpop.trf.xlu0
    %v210 = vpop.trf.xlu0
    %v211 = vpop.trf.xlu0
    %v212 = vpop.trf.xlu0
    %v213 = vpop.trf.xlu0
    %v214 = vpop.trf.xlu0
    %v215 = vpop.trf.xlu0
    %v216 = vpop.trf.xlu0
    %v217 = vpop.trf.xlu0
    %v218 = vpop.trf.xlu0
    %v219 = vpop.trf.xlu0
    %v220 = vpop.trf.xlu0
    %v221 = vpop.trf.xlu0
    %v222 = vpop.trf.xlu0
    %v223 = vld [vmem:[%s1] sm:$0xff]
    %v224 = vpack.c.bf16 %v177, %v177
    %v225 = vpack.c.bf16 %v207, %v207
    %vm226 = vcmask 64512
    %v228 = vsel %vm226, %v224, 0
    %vm230 = vcmask 1043456
    %v232 = vsel %vm230, %v225, 0
    %234 = vmatprep.subr.bf16.mxu0 0
    %235 = vmatpush1.bf16.msra.mxu0 %v232
    %236 = vmatprep.subr.bf16.mxu0 0
    %237 = vmatpush1.bf16.msra.mxu0 0
    %238 = vmatprep.subr.bf16.mxu0 0
    %239 = vmatpush1.bf16.msra.mxu0 0
    %240 = vmatprep.subr.bf16.mxu0 0
    %241 = vmatpush1.bf16.msra.mxu0 0
    %242 = vmatprep.subr.bf16.mxu0 0
    %243 = vmatpush1.bf16.msra.mxu0 0
    %244 = vmatprep.subr.bf16.mxu0 0
    %245 = vmatpush1.bf16.msra.mxu0 0
    %246 = vmatprep.subr.bf16.mxu0 0
    %247 = vmatpush1.bf16.msra.mxu0 0
    %248 = vmatprep.subr.bf16.mxu0 0
    %249 = vmatpush1.bf16.msra.mxu0 0
    %250 = vmatprep.subr.bf16.mxu0 0
    %251 = vmatpush1.bf16.msra.mxu0 0
    %252 = vmatprep.subr.bf16.mxu0 0
    %253 = vmatpush1.bf16.msra.mxu0 0
    %254 = vmatprep.subr.bf16.mxu0 0
    %255 = vmatpush1.bf16.msra.mxu0 0
    %256 = vmatprep.subr.bf16.mxu0 0
    %257 = vmatpush1.bf16.msra.mxu0 0
    %258 = vmatprep.subr.bf16.mxu0 0
    %259 = vmatpush1.bf16.msra.mxu0 0
    %260 = vmatprep.subr.bf16.mxu0 0
    %261 = vmatpush1.bf16.msra.mxu0 0
    %262 = vmatprep.subr.bf16.mxu0 0
    %263 = vmatpush1.bf16.msra.mxu0 0
    %264 = vmatprep.subr.bf16.mxu0 0
    %265 = vmatpush1.bf16.msra.mxu0 0
    %266 = vmatprep.mubr.bf16.mxu0 0
    %267 = vmatmul.mubr.bf16.gmra.mrb[0].mxu0 %v228
    %v268 = vpop.f32.mrb[0].mxu0
    %v269 = vadd.f32 %v223, %v268
    %v270 = vpop.f32.mrb[0].mxu0
    %v271 = vpop.f32.mrb[0].mxu0
    %v272 = vpop.f32.mrb[0].mxu0
    %273 = vdwg.mxu0
    %v274 = vpack.c.bf16 %v208, %v208
    %276 = vrot.lane.b32.xlu0 %v224, 120
    %v277 = vpop.permute.xlu0 %276
    %v279 = vsel %vm226, %v277, 0
    %v282 = vsel %vm230, %v274, 0
    %284 = vmatprep.subr.bf16.mxu0 0
    %285 = vmatpush1.bf16.msra.mxu0 %v282
    %286 = vmatprep.subr.bf16.mxu0 0
    %287 = vmatpush1.bf16.msra.mxu0 0
    %288 = vmatprep.subr.bf16.mxu0 0
    %289 = vmatpush1.bf16.msra.mxu0 0
    %290 = vmatprep.subr.bf16.mxu0 0
    %291 = vmatpush1.bf16.msra.mxu0 0
    %292 = vmatprep.subr.bf16.mxu0 0
    %293 = vmatpush1.bf16.msra.mxu0 0
    %294 = vmatprep.subr.bf16.mxu0 0
    %295 = vmatpush1.bf16.msra.mxu0 0
    %296 = vmatprep.subr.bf16.mxu0 0
    %297 = vmatpush1.bf16.msra.mxu0 0
    %298 = vmatprep.subr.bf16.mxu0 0
    %299 = vmatpush1.bf16.msra.mxu0 0
    %300 = vmatprep.subr.bf16.mxu0 0
    %301 = vmatpush1.bf16.msra.mxu0 0
    %302 = vmatprep.subr.bf16.mxu0 0
    %303 = vmatpush1.bf16.msra.mxu0 0
    %304 = vmatprep.subr.bf16.mxu0 0
    %305 = vmatpush1.bf16.msra.mxu0 0
    %306 = vmatprep.subr.bf16.mxu0 0
    %307 = vmatpush1.bf16.msra.mxu0 0
    %308 = vmatprep.subr.bf16.mxu0 0
    %309 = vmatpush1.bf16.msra.mxu0 0
    %310 = vmatprep.subr.bf16.mxu0 0
    %311 = vmatpush1.bf16.msra.mxu0 0
    %312 = vmatprep.subr.bf16.mxu0 0
    %313 = vmatpush1.bf16.msra.mxu0 0
    %314 = vmatprep.subr.bf16.mxu0 0
    %315 = vmatpush1.bf16.msra.mxu0 0
    %316 = vmatprep.mubr.bf16.mxu0 0
    %317 = vmatmul.mubr.bf16.gmra.mrb[0].mxu0 %v279
    %v318 = vpop.f32.mrb[0].mxu0
    %v319 = vadd.f32 %v223, %v318
    %v320 = vpop.f32.mrb[0].mxu0
    %v321 = vpop.f32.mrb[0].mxu0
    %v322 = vpop.f32.mrb[0].mxu0
    %323 = vdwg.mxu0
    %v324 = vpack.c.bf16 %v209, %v209
    %325 = vrot.lane.b32.xlu0 %v224, 112
    %v326 = vpop.permute.xlu0 %325
    %v328 = vsel %vm226, %v326, 0
    %v331 = vsel %vm230, %v324, 0
    %333 = vmatprep.subr.bf16.mxu0 0
    %334 = vmatpush1.bf16.msra.mxu0 %v331
    %335 = vmatprep.subr.bf16.mxu0 0
    %336 = vmatpush1.bf16.msra.mxu0 0
    %337 = vmatprep.subr.bf16.mxu0 0
    %338 = vmatpush1.bf16.msra.mxu0 0
    %339 = vmatprep.subr.bf16.mxu0 0
    %340 = vmatpush1.bf16.msra.mxu0 0
    %341 = vmatprep.subr.bf16.mxu0 0
    %342 = vmatpush1.bf16.msra.mxu0 0
    %343 = vmatprep.subr.bf16.mxu0 0
    %344 = vmatpush1.bf16.msra.mxu0 0
    %345 = vmatprep.subr.bf16.mxu0 0
    %346 = vmatpush1.bf16.msra.mxu0 0
    %347 = vmatprep.subr.bf16.mxu0 0
    %348 = vmatpush1.bf16.msra.mxu0 0
    %349 = vmatprep.subr.bf16.mxu0 0
    %350 = vmatpush1.bf16.msra.mxu0 0
    %351 = vmatprep.subr.bf16.mxu0 0
    %352 = vmatpush1.bf16.msra.mxu0 0
    %353 = vmatprep.subr.bf16.mxu0 0
    %354 = vmatpush1.bf16.msra.mxu0 0
    %355 = vmatprep.subr.bf16.mxu0 0
    %356 = vmatpush1.bf16.msra.mxu0 0
    %357 = vmatprep.subr.bf16.mxu0 0
    %358 = vmatpush1.bf16.msra.mxu0 0
    %359 = vmatprep.subr.bf16.mxu0 0
    %360 = vmatpush1.bf16.msra.mxu0 0
    %361 = vmatprep.subr.bf16.mxu0 0
    %362 = vmatpush1.bf16.msra.mxu0 0
    %363 = vmatprep.subr.bf16.mxu0 0
    %364 = vmatpush1.bf16.msra.mxu0 0
    %365 = vmatprep.mubr.bf16.mxu0 0
    %366 = vmatmul.mubr.bf16.gmra.mrb[0].mxu0 %v328
    %v367 = vpop.f32.mrb[0].mxu0
    %v368 = vadd.f32 %v223, %v367
    %v369 = vpop.f32.mrb[0].mxu0
    %v370 = vpop.f32.mrb[0].mxu0
    %v371 = vpop.f32.mrb[0].mxu0
    %372 = vdwg.mxu0
    %v373 = vpack.c.bf16 %v210, %v210
    %374 = vrot.lane.b32.xlu0 %v224, 104
    %v375 = vpop.permute.xlu0 %374
    %v377 = vsel %vm226, %v375, 0
    %v380 = vsel %vm230, %v373, 0
    %382 = vmatprep.subr.bf16.mxu0 0
    %383 = vmatpush1.bf16.msra.mxu0 %v380
    %384 = vmatprep.subr.bf16.mxu0 0
    %385 = vmatpush1.bf16.msra.mxu0 0
    %386 = vmatprep.subr.bf16.mxu0 0
    %387 = vmatpush1.bf16.msra.mxu0 0
    %388 = vmatprep.subr.bf16.mxu0 0
    %389 = vmatpush1.bf16.msra.mxu0 0
    %390 = vmatprep.subr.bf16.mxu0 0
    %391 = vmatpush1.bf16.msra.mxu0 0
    %392 = vmatprep.subr.bf16.mxu0 0
    %393 = vmatpush1.bf16.msra.mxu0 0
    %394 = vmatprep.subr.bf16.mxu0 0
    %395 = vmatpush1.bf16.msra.mxu0 0
    %396 = vmatprep.subr.bf16.mxu0 0
    %397 = vmatpush1.bf16.msra.mxu0 0
    %398 = vmatprep.subr.bf16.mxu0 0
    %399 = vmatpush1.bf16.msra.mxu0 0
    %400 = vmatprep.subr.bf16.mxu0 0
    %401 = vmatpush1.bf16.msra.mxu0 0
    %402 = vmatprep.subr.bf16.mxu0 0
    %403 = vmatpush1.bf16.msra.mxu0 0
    %404 = vmatprep.subr.bf16.mxu0 0
    %405 = vmatpush1.bf16.msra.mxu0 0
    %406 = vmatprep.subr.bf16.mxu0 0
    %407 = vmatpush1.bf16.msra.mxu0 0
    %408 = vmatprep.subr.bf16.mxu0 0
    %409 = vmatpush1.bf16.msra.mxu0 0
    %410 = vmatprep.subr.bf16.mxu0 0
    %411 = vmatpush1.bf16.msra.mxu0 0
    %412 = vmatprep.subr.bf16.mxu0 0
    %413 = vmatpush1.bf16.msra.mxu0 0
    %414 = vmatprep.mubr.bf16.mxu0 0
    %415 = vmatmul.mubr.bf16.gmra.mrb[0].mxu0 %v377
    %v416 = vpop.f32.mrb[0].mxu0
    %v417 = vadd.f32 %v223, %v416
    %v418 = vpop.f32.mrb[0].mxu0
    %v419 = vpop.f32.mrb[0].mxu0
    %v420 = vpop.f32.mrb[0].mxu0
    %421 = vdwg.mxu0
    %s422 = scalar_lea.vmem %s1, 8
    %v423 = vld [vmem:[%s422] sm:$0xff]
    %v424 = vpack.c.bf16 %v180, %v180
    %426 = vrot.lane.b32.xlu0 %v225, 120
    %v427 = vpop.permute.xlu0 %426
    %v429 = vsel %vm226, %v424, 0
    %v432 = vsel %vm230, %v427, 0
    %434 = vmatprep.subr.bf16.mxu0 0
    %435 = vmatpush1.bf16.msra.mxu0 %v432
    %436 = vmatprep.subr.bf16.mxu0 0
    %437 = vmatpush1.bf16.msra.mxu0 0
    %438 = vmatprep.subr.bf16.mxu0 0
    %439 = vmatpush1.bf16.msra.mxu0 0
    %440 = vmatprep.subr.bf16.mxu0 0
    %441 = vmatpush1.bf16.msra.mxu0 0
    %442 = vmatprep.subr.bf16.mxu0 0
    %443 = vmatpush1.bf16.msra.mxu0 0
    %444 = vmatprep.subr.bf16.mxu0 0
    %445 = vmatpush1.bf16.msra.mxu0 0
    %446 = vmatprep.subr.bf16.mxu0 0
    %447 = vmatpush1.bf16.msra.mxu0 0
    %448 = vmatprep.subr.bf16.mxu0 0
    %449 = vmatpush1.bf16.msra.mxu0 0
    %450 = vmatprep.subr.bf16.mxu0 0
    %451 = vmatpush1.bf16.msra.mxu0 0
    %452 = vmatprep.subr.bf16.mxu0 0
    %453 = vmatpush1.bf16.msra.mxu0 0
    %454 = vmatprep.subr.bf16.mxu0 0
    %455 = vmatpush1.bf16.msra.mxu0 0
    %456 = vmatprep.subr.bf16.mxu0 0
    %457 = vmatpush1.bf16.msra.mxu0 0
    %458 = vmatprep.subr.bf16.mxu0 0
    %459 = vmatpush1.bf16.msra.mxu0 0
    %460 = vmatprep.subr.bf16.mxu0 0
    %461 = vmatpush1.bf16.msra.mxu0 0
    %462 = vmatprep.subr.bf16.mxu0 0
    %463 = vmatpush1.bf16.msra.mxu0 0
    %464 = vmatprep.subr.bf16.mxu0 0
    %465 = vmatpush1.bf16.msra.mxu0 0
    %466 = vmatprep.mubr.bf16.mxu0 0
    %467 = vmatmul.mubr.bf16.gmra.mrb[0].mxu0 %v429
    %v468 = vpop.f32.mrb[0].mxu0
    %v469 = vadd.f32 %v423, %v468
    %v470 = vpop.f32.mrb[0].mxu0
    %v471 = vpop.f32.mrb[0].mxu0
    %v472 = vpop.f32.mrb[0].mxu0
    %473 = vdwg.mxu0
    %475 = vrot.lane.b32.xlu0 %v424, 120
    %v476 = vpop.permute.xlu0 %475
    %478 = vrot.lane.b32.xlu0 %v274, 120
    %v479 = vpop.permute.xlu0 %478
    %v481 = vsel %vm226, %v476, 0
    %v484 = vsel %vm230, %v479, 0
    %486 = vmatprep.subr.bf16.mxu0 0
    %487 = vmatpush1.bf16.msra.mxu0 %v484
    %488 = vmatprep.subr.bf16.mxu0 0
    %489 = vmatpush1.bf16.msra.mxu0 0
    %490 = vmatprep.subr.bf16.mxu0 0
    %491 = vmatpush1.bf16.msra.mxu0 0
    %492 = vmatprep.subr.bf16.mxu0 0
    %493 = vmatpush1.bf16.msra.mxu0 0
    %494 = vmatprep.subr.bf16.mxu0 0
    %495 = vmatpush1.bf16.msra.mxu0 0
    %496 = vmatprep.subr.bf16.mxu0 0
    %497 = vmatpush1.bf16.msra.mxu0 0
    %498 = vmatprep.subr.bf16.mxu0 0
    %499 = vmatpush1.bf16.msra.mxu0 0
    %500 = vmatprep.subr.bf16.mxu0 0
    %501 = vmatpush1.bf16.msra.mxu0 0
    %502 = vmatprep.subr.bf16.mxu0 0
    %503 = vmatpush1.bf16.msra.mxu0 0
    %504 = vmatprep.subr.bf16.mxu0 0
    %505 = vmatpush1.bf16.msra.mxu0 0
    %506 = vmatprep.subr.bf16.mxu0 0
    %507 = vmatpush1.bf16.msra.mxu0 0
    %508 = vmatprep.subr.bf16.mxu0 0
    %509 = vmatpush1.bf16.msra.mxu0 0
    %510 = vmatprep.subr.bf16.mxu0 0
    %511 = vmatpush1.bf16.msra.mxu0 0
    %512 = vmatprep.subr.bf16.mxu0 0
    %513 = vmatpush1.bf16.msra.mxu0 0
    %514 = vmatprep.subr.bf16.mxu0 0
    %515 = vmatpush1.bf16.msra.mxu0 0
    %516 = vmatprep.subr.bf16.mxu0 0
    %517 = vmatpush1.bf16.msra.mxu0 0
    %518 = vmatprep.mubr.bf16.mxu0 0
    %519 = vmatmul.mubr.bf16.gmra.mrb[0].mxu0 %v481
    %v520 = vpop.f32.mrb[0].mxu0
    %v521 = vadd.f32 %v423, %v520
    %v522 = vpop.f32.mrb[0].mxu0
    %v523 = vpop.f32.mrb[0].mxu0
    %v524 = vpop.f32.mrb[0].mxu0
    %525 = vdwg.mxu0
    %526 = vrot.lane.b32.xlu0 %v424, 112
    %v527 = vpop.permute.xlu0 %526
    %529 = vrot.lane.b32.xlu0 %v324, 120
    %v530 = vpop.permute.xlu0 %529
    %v532 = vsel %vm226, %v527, 0
    %v535 = vsel %vm230, %v530, 0
    %537 = vmatprep.subr.bf16.mxu0 0
    %538 = vmatpush1.bf16.msra.mxu0 %v535
    %539 = vmatprep.subr.bf16.mxu0 0
    %540 = vmatpush1.bf16.msra.mxu0 0
    %541 = vmatprep.subr.bf16.mxu0 0
    %542 = vmatpush1.bf16.msra.mxu0 0
    %543 = vmatprep.subr.bf16.mxu0 0
    %544 = vmatpush1.bf16.msra.mxu0 0
    %545 = vmatprep.subr.bf16.mxu0 0
    %546 = vmatpush1.bf16.msra.mxu0 0
    %547 = vmatprep.subr.bf16.mxu0 0
    %548 = vmatpush1.bf16.msra.mxu0 0
    %549 = vmatprep.subr.bf16.mxu0 0
    %550 = vmatpush1.bf16.msra.mxu0 0
    %551 = vmatprep.subr.bf16.mxu0 0
    %552 = vmatpush1.bf16.msra.mxu0 0
    %553 = vmatprep.subr.bf16.mxu0 0
    %554 = vmatpush1.bf16.msra.mxu0 0
    %555 = vmatprep.subr.bf16.mxu0 0
    %556 = vmatpush1.bf16.msra.mxu0 0
    %557 = vmatprep.subr.bf16.mxu0 0
    %558 = vmatpush1.bf16.msra.mxu0 0
    %559 = vmatprep.subr.bf16.mxu0 0
    %560 = vmatpush1.bf16.msra.mxu0 0
    %561 = vmatprep.subr.bf16.mxu0 0
    %562 = vmatpush1.bf16.msra.mxu0 0
    %563 = vmatprep.subr.bf16.mxu0 0
    %564 = vmatpush1.bf16.msra.mxu0 0
    %565 = vmatprep.subr.bf16.mxu0 0
    %566 = vmatpush1.bf16.msra.mxu0 0
    %567 = vmatprep.subr.bf16.mxu0 0
    %568 = vmatpush1.bf16.msra.mxu0 0
    %569 = vmatprep.mubr.bf16.mxu0 0
    %570 = vmatmul.mubr.bf16.gmra.mrb[0].mxu0 %v532
    %v571 = vpop.f32.mrb[0].mxu0
    %v572 = vadd.f32 %v423, %v571
    %v573 = vpop.f32.mrb[0].mxu0
    %v574 = vpop.f32.mrb[0].mxu0
    %v575 = vpop.f32.mrb[0].mxu0
    %576 = vdwg.mxu0
    %577 = vrot.lane.b32.xlu0 %v424, 104
    %v578 = vpop.permute.xlu0 %577
    %580 = vrot.lane.b32.xlu0 %v373, 120
    %v581 = vpop.permute.xlu0 %580
    %v583 = vsel %vm226, %v578, 0
    %v586 = vsel %vm230, %v581, 0
    %588 = vmatprep.subr.bf16.mxu0 0
    %589 = vmatpush1.bf16.msra.mxu0 %v586
    %590 = vmatprep.subr.bf16.mxu0 0
    %591 = vmatpush1.bf16.msra.mxu0 0
    %592 = vmatprep.subr.bf16.mxu0 0
    %593 = vmatpush1.bf16.msra.mxu0 0
    %594 = vmatprep.subr.bf16.mxu0 0
    %595 = vmatpush1.bf16.msra.mxu0 0
    %596 = vmatprep.subr.bf16.mxu0 0
    %597 = vmatpush1.bf16.msra.mxu0 0
    %598 = vmatprep.subr.bf16.mxu0 0
    %599 = vmatpush1.bf16.msra.mxu0 0
    %600 = vmatprep.subr.bf16.mxu0 0
    %601 = vmatpush1.bf16.msra.mxu0 0
    %602 = vmatprep.subr.bf16.mxu0 0
    %603 = vmatpush1.bf16.msra.mxu0 0
    %604 = vmatprep.subr.bf16.mxu0 0
    %605 = vmatpush1.bf16.msra.mxu0 0
    %606 = vmatprep.subr.bf16.mxu0 0
    %607 = vmatpush1.bf16.msra.mxu0 0
    %608 = vmatprep.subr.bf16.mxu0 0
    %609 = vmatpush1.bf16.msra.mxu0 0
    %610 = vmatprep.subr.bf16.mxu0 0
    %611 = vmatpush1.bf16.msra.mxu0 0
    %612 = vmatprep.subr.bf16.mxu0 0
    %613 = vmatpush1.bf16.msra.mxu0 0
    %614 = vmatprep.subr.bf16.mxu0 0
    %615 = vmatpush1.bf16.msra.mxu0 0
    %616 = vmatprep.subr.bf16.mxu0 0
    %617 = vmatpush1.bf16.msra.mxu0 0
    %618 = vmatprep.subr.bf16.mxu0 0
    %619 = vmatpush1.bf16.msra.mxu0 0
    %620 = vmatprep.mubr.bf16.mxu0 0
    %621 = vmatmul.mubr.bf16.gmra.mrb[0].mxu0 %v583
    %v622 = vpop.f32.mrb[0].mxu0
    %v623 = vadd.f32 %v423, %v622
    %v624 = vpop.f32.mrb[0].mxu0
    %v625 = vpop.f32.mrb[0].mxu0
    %v626 = vpop.f32.mrb[0].mxu0
    %627 = vdwg.mxu0
    %v628 = vsel %vm226, %v269, -inf
    %629 = vmax.xlane.f32.xlu0 %v628
    %v630 = vpop.xlane.xlu0 %629
    %v631 = vsel %vm226, %v319, -inf
    %632 = vmax.xlane.f32.xlu0 %v631
    %v633 = vpop.xlane.xlu0 %632
    %v634 = vsel %vm226, %v368, -inf
    %635 = vmax.xlane.f32.xlu0 %v634
    %v636 = vpop.xlane.xlu0 %635
    %v637 = vsel %vm226, %v417, -inf
    %638 = vmax.xlane.f32.xlu0 %v637
    %v639 = vpop.xlane.xlu0 %638
    %v640 = vsel %vm226, %v469, -inf
    %641 = vmax.xlane.f32.xlu0 %v640
    %v642 = vpop.xlane.xlu0 %641
    %v643 = vsel %vm226, %v521, -inf
    %644 = vmax.xlane.f32.xlu0 %v643
    %v645 = vpop.xlane.xlu0 %644
    %v646 = vsel %vm226, %v572, -inf
    %647 = vmax.xlane.f32.xlu0 %v646
    %v648 = vpop.xlane.xlu0 %647
    %v649 = vsel %vm226, %v623, -inf
    %650 = vmax.xlane.f32.xlu0 %v649
    %v651 = vpop.xlane.xlu0 %650
    %v652 = vsub.f32 %v269, %v630
    %v653 = vsub.f32 %v319, %v633
    %v654 = vsub.f32 %v368, %v636
    %v655 = vsub.f32 %v417, %v639
    %v656 = vsub.f32 %v469, %v642
    %v657 = vsub.f32 %v521, %v645
    %v658 = vsub.f32 %v572, %v648
    %v659 = vsub.f32 %v623, %v651
    %v660 = vmul.f32 %v652, 1.442695
    %v661 = vpow.pop %v660
    %v662 = vmul.f32 %v653, 1.442695
    %v663 = vpow.pop %v662
    %v664 = vmul.f32 %v654, 1.442695
    %v665 = vpow.pop %v664
    %v666 = vmul.f32 %v655, 1.442695
    %v667 = vpow.pop %v666
    %v668 = vmul.f32 %v656, 1.442695
    %v669 = vpow.pop %v668
    %v670 = vmul.f32 %v657, 1.442695
    %v671 = vpow.pop %v670
    %v672 = vmul.f32 %v658, 1.442695
    %v673 = vpow.pop %v672
    %v674 = vmul.f32 %v659, 1.442695
    %v675 = vpow.pop %v674
    %v676 = vsel %vm226, %v661, 0.0
    %677 = vadd.xlane.f32.xlu0 %v676
    %v678 = vpop.xlane.xlu0 %677
    %v679 = vsel %vm226, %v663, 0.0
    %680 = vadd.xlane.f32.xlu0 %v679
    %v681 = vpop.xlane.xlu0 %680
    %v682 = vsel %vm226, %v665, 0.0
    %683 = vadd.xlane.f32.xlu0 %v682
    %v684 = vpop.xlane.xlu0 %683
    %v685 = vsel %vm226, %v667, 0.0
    %686 = vadd.xlane.f32.xlu0 %v685
    %v687 = vpop.xlane.xlu0 %686
    %v688 = vsel %vm226, %v669, 0.0
    %689 = vadd.xlane.f32.xlu0 %v688
    %v690 = vpop.xlane.xlu0 %689
    %v691 = vsel %vm226, %v671, 0.0
    %692 = vadd.xlane.f32.xlu0 %v691
    %v693 = vpop.xlane.xlu0 %692
    %v694 = vsel %vm226, %v673, 0.0
    %695 = vadd.xlane.f32.xlu0 %v694
    %v696 = vpop.xlane.xlu0 %695
    %v697 = vsel %vm226, %v675, 0.0
    %698 = vadd.xlane.f32.xlu0 %v697
    %v699 = vpop.xlane.xlu0 %698
    %v700 = vrcp.pop %v678
    %v701 = vrcp.pop %v681
    %v702 = vrcp.pop %v684
    %v703 = vrcp.pop %v687
    %v704 = vrcp.pop %v690
    %v705 = vrcp.pop %v693
    %v706 = vrcp.pop %v696
    %v707 = vrcp.pop %v699
    %v708 = vmul.f32 %v661, %v700
    %v709 = vmul.f32 %v663, %v701
    %v710 = vmul.f32 %v665, %v702
    %v711 = vmul.f32 %v667, %v703
    %v712 = vmul.f32 %v669, %v704
    %v713 = vmul.f32 %v671, %v705
    %v714 = vmul.f32 %v673, %v706
    %v715 = vmul.f32 %v675, %v707
    %v716 = vpack.c.bf16 %v708, %v708
    %717 = vrot.lane.b32.xlu0 %v224, 64
    %v718 = vpop.permute.xlu0 %717
    %v720 = vsel %vm226, %v716, 0
    %v723 = vsel %vm230, %v718, 0
    %725 = vmatprep.subr.bf16.mxu0 0
    %726 = vmatpush1.bf16.msra.mxu0 %v723
    %727 = vmatprep.subr.bf16.mxu0 0
    %728 = vmatpush1.bf16.msra.mxu0 0
    %729 = vmatprep.subr.bf16.mxu0 0
    %730 = vmatpush1.bf16.msra.mxu0 0
    %731 = vmatprep.subr.bf16.mxu0 0
    %732 = vmatpush1.bf16.msra.mxu0 0
    %733 = vmatprep.subr.bf16.mxu0 0
    %734 = vmatpush1.bf16.msra.mxu0 0
    %735 = vmatprep.subr.bf16.mxu0 0
    %736 = vmatpush1.bf16.msra.mxu0 0
    %737 = vmatprep.subr.bf16.mxu0 0
    %738 = vmatpush1.bf16.msra.mxu0 0
    %739 = vmatprep.subr.bf16.mxu0 0
    %740 = vmatpush1.bf16.msra.mxu0 0
    %741 = vmatprep.subr.bf16.mxu0 0
    %742 = vmatpush1.bf16.msra.mxu0 0
    %743 = vmatprep.subr.bf16.mxu0 0
    %744 = vmatpush1.bf16.msra.mxu0 0
    %745 = vmatprep.subr.bf16.mxu0 0
    %746 = vmatpush1.bf16.msra.mxu0 0
    %747 = vmatprep.subr.bf16.mxu0 0
    %748 = vmatpush1.bf16.msra.mxu0 0
    %749 = vmatprep.subr.bf16.mxu0 0
    %750 = vmatpush1.bf16.msra.mxu0 0
    %751 = vmatprep.subr.bf16.mxu0 0
    %752 = vmatpush1.bf16.msra.mxu0 0
    %753 = vmatprep.subr.bf16.mxu0 0
    %754 = vmatpush1.bf16.msra.mxu0 0
    %755 = vmatprep.subr.bf16.mxu0 0
    %756 = vmatpush1.bf16.msra.mxu0 0
    %757 = vmatprep.mubr.bf16.mxu0 0
    %758 = vmatmul.mubr.bf16.gmra.mrb[0].mxu0 %v720
    %v759 = vpop.f32.mrb[0].mxu0
    %v760 = vadd.f32 0.0, %v759
    %v761 = vpop.f32.mrb[0].mxu0
    %v762 = vpop.f32.mrb[0].mxu0
    %v763 = vpop.f32.mrb[0].mxu0
    %764 = vdwg.mxu0
    %v765 = vpack.c.bf16 %v712, %v712
    %766 = vrot.lane.b32.xlu0 %v424, 64
    %v767 = vpop.permute.xlu0 %766
    %v769 = vsel %vm226, %v765, 0
    %v772 = vsel %vm230, %v767, 0
    %774 = vmatprep.subr.bf16.mxu0 0
    %775 = vmatpush1.bf16.msra.mxu0 %v772
    %776 = vmatprep.subr.bf16.mxu0 0
    %777 = vmatpush1.bf16.msra.mxu0 0
    %778 = vmatprep.subr.bf16.mxu0 0
    %779 = vmatpush1.bf16.msra.mxu0 0
    %780 = vmatprep.subr.bf16.mxu0 0
    %781 = vmatpush1.bf16.msra.mxu0 0
    %782 = vmatprep.subr.bf16.mxu0 0
    %783 = vmatpush1.bf16.msra.mxu0 0
    %784 = vmatprep.subr.bf16.mxu0 0
    %785 = vmatpush1.bf16.msra.mxu0 0
    %786 = vmatprep.subr.bf16.mxu0 0
    %787 = vmatpush1.bf16.msra.mxu0 0
    %788 = vmatprep.subr.bf16.mxu0 0
    %789 = vmatpush1.bf16.msra.mxu0 0
    %790 = vmatprep.subr.bf16.mxu0 0
    %791 = vmatpush1.bf16.msra.mxu0 0
    %792 = vmatprep.subr.bf16.mxu0 0
    %793 = vmatpush1.bf16.msra.mxu0 0
    %794 = vmatprep.subr.bf16.mxu0 0
    %795 = vmatpush1.bf16.msra.mxu0 0
    %796 = vmatprep.subr.bf16.mxu0 0
    %797 = vmatpush1.bf16.msra.mxu0 0
    %798 = vmatprep.subr.bf16.mxu0 0
    %799 = vmatpush1.bf16.msra.mxu0 0
    %800 = vmatprep.subr.bf16.mxu0 0
    %801 = vmatpush1.bf16.msra.mxu0 0
    %802 = vmatprep.subr.bf16.mxu0 0
    %803 = vmatpush1.bf16.msra.mxu0 0
    %804 = vmatprep.subr.bf16.mxu0 0
    %805 = vmatpush1.bf16.msra.mxu0 0
    %806 = vmatprep.mubr.bf16.mxu0 0
    %807 = vmatmul.mubr.bf16.gmra.mrb[0].mxu0 %v769
    %v808 = vpop.f32.mrb[0].mxu0
    %v809 = vadd.f32 0.0, %v808
    %v810 = vpop.f32.mrb[0].mxu0
    %v811 = vpop.f32.mrb[0].mxu0
    %v812 = vpop.f32.mrb[0].mxu0
    %813 = vdwg.mxu0
    %v814 = vpack.c.bf16 %v709, %v709
    %815 = vrot.lane.b32.xlu0 %v224, 56
    %v816 = vpop.permute.xlu0 %815
    %v818 = vsel %vm226, %v814, 0
    %v821 = vsel %vm230, %v816, 0
    %823 = vmatprep.subr.bf16.mxu0 0
    %824 = vmatpush1.bf16.msra.mxu0 %v821
    %825 = vmatprep.subr.bf16.mxu0 0
    %826 = vmatpush1.bf16.msra.mxu0 0
    %827 = vmatprep.subr.bf16.mxu0 0
    %828 = vmatpush1.bf16.msra.mxu0 0
    %829 = vmatprep.subr.bf16.mxu0 0
    %830 = vmatpush1.bf16.msra.mxu0 0
    %831 = vmatprep.subr.bf16.mxu0 0
    %832 = vmatpush1.bf16.msra.mxu0 0
    %833 = vmatprep.subr.bf16.mxu0 0
    %834 = vmatpush1.bf16.msra.mxu0 0
    %835 = vmatprep.subr.bf16.mxu0 0
    %836 = vmatpush1.bf16.msra.mxu0 0
    %837 = vmatprep.subr.bf16.mxu0 0
    %838 = vmatpush1.bf16.msra.mxu0 0
    %839 = vmatprep.subr.bf16.mxu0 0
    %840 = vmatpush1.bf16.msra.mxu0 0
    %841 = vmatprep.subr.bf16.mxu0 0
    %842 = vmatpush1.bf16.msra.mxu0 0
    %843 = vmatprep.subr.bf16.mxu0 0
    %844 = vmatpush1.bf16.msra.mxu0 0
    %845 = vmatprep.subr.bf16.mxu0 0
    %846 = vmatpush1.bf16.msra.mxu0 0
    %847 = vmatprep.subr.bf16.mxu0 0
    %848 = vmatpush1.bf16.msra.mxu0 0
    %849 = vmatprep.subr.bf16.mxu0 0
    %850 = vmatpush1.bf16.msra.mxu0 0
    %851 = vmatprep.subr.bf16.mxu0 0
    %852 = vmatpush1.bf16.msra.mxu0 0
    %853 = vmatprep.subr.bf16.mxu0 0
    %854 = vmatpush1.bf16.msra.mxu0 0
    %855 = vmatprep.mubr.bf16.mxu0 0
    %856 = vmatmul.mubr.bf16.gmra.mrb[0].mxu0 %v818
    %v857 = vpop.f32.mrb[0].mxu0
    %v858 = vadd.f32 0.0, %v857
    %v859 = vpop.f32.mrb[0].mxu0
    %v860 = vpop.f32.mrb[0].mxu0
    %v861 = vpop.f32.mrb[0].mxu0
    %862 = vdwg.mxu0
    %v863 = vpack.c.bf16 %v713, %v713
    %864 = vrot.lane.b32.xlu0 %v424, 56
    %v865 = vpop.permute.xlu0 %864
    %v867 = vsel %vm226, %v863, 0
    %v870 = vsel %vm230, %v865, 0
    %872 = vmatprep.subr.bf16.mxu0 0
    %873 = vmatpush1.bf16.msra.mxu0 %v870
    %874 = vmatprep.subr.bf16.mxu0 0
    %875 = vmatpush1.bf16.msra.mxu0 0
    %876 = vmatprep.subr.bf16.mxu0 0
    %877 = vmatpush1.bf16.msra.mxu0 0
    %878 = vmatprep.subr.bf16.mxu0 0
    %879 = vmatpush1.bf16.msra.mxu0 0
    %880 = vmatprep.subr.bf16.mxu0 0
    %881 = vmatpush1.bf16.msra.mxu0 0
    %882 = vmatprep.subr.bf16.mxu0 0
    %883 = vmatpush1.bf16.msra.mxu0 0
    %884 = vmatprep.subr.bf16.mxu0 0
    %885 = vmatpush1.bf16.msra.mxu0 0
    %886 = vmatprep.subr.bf16.mxu0 0
    %887 = vmatpush1.bf16.msra.mxu0 0
    %888 = vmatprep.subr.bf16.mxu0 0
    %889 = vmatpush1.bf16.msra.mxu0 0
    %890 = vmatprep.subr.bf16.mxu0 0
    %891 = vmatpush1.bf16.msra.mxu0 0
    %892 = vmatprep.subr.bf16.mxu0 0
    %893 = vmatpush1.bf16.msra.mxu0 0
    %894 = vmatprep.subr.bf16.mxu0 0
    %895 = vmatpush1.bf16.msra.mxu0 0
    %896 = vmatprep.subr.bf16.mxu0 0
    %897 = vmatpush1.bf16.msra.mxu0 0
    %898 = vmatprep.subr.bf16.mxu0 0
    %899 = vmatpush1.bf16.msra.mxu0 0
    %900 = vmatprep.subr.bf16.mxu0 0
    %901 = vmatpush1.bf16.msra.mxu0 0
    %902 = vmatprep.subr.bf16.mxu0 0
    %903 = vmatpush1.bf16.msra.mxu0 0
    %904 = vmatprep.mubr.bf16.mxu0 0
    %905 = vmatmul.mubr.bf16.gmra.mrb[0].mxu0 %v867
    %v906 = vpop.f32.mrb[0].mxu0
    %v907 = vadd.f32 0.0, %v906
    %v908 = vpop.f32.mrb[0].mxu0
    %v909 = vpop.f32.mrb[0].mxu0
    %v910 = vpop.f32.mrb[0].mxu0
    %911 = vdwg.mxu0
    %v912 = vpack.c.bf16 %v710, %v710
    %913 = vrot.lane.b32.xlu0 %v224, 48
    %v914 = vpop.permute.xlu0 %913
    %v916 = vsel %vm226, %v912, 0
    %v919 = vsel %vm230, %v914, 0
    %921 = vmatprep.subr.bf16.mxu0 0
    %922 = vmatpush1.bf16.msra.mxu0 %v919
    %923 = vmatprep.subr.bf16.mxu0 0
    %924 = vmatpush1.bf16.msra.mxu0 0
    %925 = vmatprep.subr.bf16.mxu0 0
    %926 = vmatpush1.bf16.msra.mxu0 0
    %927 = vmatprep.subr.bf16.mxu0 0
    %928 = vmatpush1.bf16.msra.mxu0 0
    %929 = vmatprep.subr.bf16.mxu0 0
    %930 = vmatpush1.bf16.msra.mxu0 0
    %931 = vmatprep.subr.bf16.mxu0 0
    %932 = vmatpush1.bf16.msra.mxu0 0
    %933 = vmatprep.subr.bf16.mxu0 0
    %934 = vmatpush1.bf16.msra.mxu0 0
    %935 = vmatprep.subr.bf16.mxu0 0
    %936 = vmatpush1.bf16.msra.mxu0 0
    %937 = vmatprep.subr.bf16.mxu0 0
    %938 = vmatpush1.bf16.msra.mxu0 0
    %939 = vmatprep.subr.bf16.mxu0 0
    %940 = vmatpush1.bf16.msra.mxu0 0
    %941 = vmatprep.subr.bf16.mxu0 0
    %942 = vmatpush1.bf16.msra.mxu0 0
    %943 = vmatprep.subr.bf16.mxu0 0
    %944 = vmatpush1.bf16.msra.mxu0 0
    %945 = vmatprep.subr.bf16.mxu0 0
    %946 = vmatpush1.bf16.msra.mxu0 0
    %947 = vmatprep.subr.bf16.mxu0 0
    %948 = vmatpush1.bf16.msra.mxu0 0
    %949 = vmatprep.subr.bf16.mxu0 0
    %950 = vmatpush1.bf16.msra.mxu0 0
    %951 = vmatprep.subr.bf16.mxu0 0
    %952 = vmatpush1.bf16.msra.mxu0 0
    %953 = vmatprep.mubr.bf16.mxu0 0
    %954 = vmatmul.mubr.bf16.gmra.mrb[0].mxu0 %v916
    %v955 = vpop.f32.mrb[0].mxu0
    %v956 = vadd.f32 0.0, %v955
    %v957 = vpop.f32.mrb[0].mxu0
    %v958 = vpop.f32.mrb[0].mxu0
    %v959 = vpop.f32.mrb[0].mxu0
    %960 = vdwg.mxu0
    %v961 = vpack.c.bf16 %v714, %v714
    %962 = vrot.lane.b32.xlu0 %v424, 48
    %v963 = vpop.permute.xlu0 %962
    %v965 = vsel %vm226, %v961, 0
    %v968 = vsel %vm230, %v963, 0
    %970 = vmatprep.subr.bf16.mxu0 0
    %971 = vmatpush1.bf16.msra.mxu0 %v968
    %972 = vmatprep.subr.bf16.mxu0 0
    %973 = vmatpush1.bf16.msra.mxu0 0
    %974 = vmatprep.subr.bf16.mxu0 0
    %975 = vmatpush1.bf16.msra.mxu0 0
    %976 = vmatprep.subr.bf16.mxu0 0
    %977 = vmatpush1.bf16.msra.mxu0 0
    %978 = vmatprep.subr.bf16.mxu0 0
    %979 = vmatpush1.bf16.msra.mxu0 0
    %980 = vmatprep.subr.bf16.mxu0 0
    %981 = vmatpush1.bf16.msra.mxu0 0
    %982 = vmatprep.subr.bf16.mxu0 0
    %983 = vmatpush1.bf16.msra.mxu0 0
    %984 = vmatprep.subr.bf16.mxu0 0
    %985 = vmatpush1.bf16.msra.mxu0 0
    %986 = vmatprep.subr.bf16.mxu0 0
    %987 = vmatpush1.bf16.msra.mxu0 0
    %988 = vmatprep.subr.bf16.mxu0 0
    %989 = vmatpush1.bf16.msra.mxu0 0
    %990 = vmatprep.subr.bf16.mxu0 0
    %991 = vmatpush1.bf16.msra.mxu0 0
    %992 = vmatprep.subr.bf16.mxu0 0
    %993 = vmatpush1.bf16.msra.mxu0 0
    %994 = vmatprep.subr.bf16.mxu0 0
    %995 = vmatpush1.bf16.msra.mxu0 0
    %996 = vmatprep.subr.bf16.mxu0 0
    %997 = vmatpush1.bf16.msra.mxu0 0
    %998 = vmatprep.subr.bf16.mxu0 0
    %999 = vmatpush1.bf16.msra.mxu0 0
    %1000 = vmatprep.subr.bf16.mxu0 0
    %1001 = vmatpush1.bf16.msra.mxu0 0
    %1002 = vmatprep.mubr.bf16.mxu0 0
    %1003 = vmatmul.mubr.bf16.gmra.mrb[0].mxu0 %v965
    %v1004 = vpop.f32.mrb[0].mxu0
    %v1005 = vadd.f32 0.0, %v1004
    %v1006 = vpop.f32.mrb[0].mxu0
    %v1007 = vpop.f32.mrb[0].mxu0
    %v1008 = vpop.f32.mrb[0].mxu0
    %1009 = vdwg.mxu0
    %v1010 = vpack.c.bf16 %v711, %v711
    %1011 = vrot.lane.b32.xlu0 %v224, 40
    %v1012 = vpop.permute.xlu0 %1011
    %v1014 = vsel %vm226, %v1010, 0
    %v1017 = vsel %vm230, %v1012, 0
    %1019 = vmatprep.subr.bf16.mxu0 0
    %1020 = vmatpush1.bf16.msra.mxu0 %v1017
    %1021 = vmatprep.subr.bf16.mxu0 0
    %1022 = vmatpush1.bf16.msra.mxu0 0
    %1023 = vmatprep.subr.bf16.mxu0 0
    %1024 = vmatpush1.bf16.msra.mxu0 0
    %1025 = vmatprep.subr.bf16.mxu0 0
    %1026 = vmatpush1.bf16.msra.mxu0 0
    %1027 = vmatprep.subr.bf16.mxu0 0
    %1028 = vmatpush1.bf16.msra.mxu0 0
    %1029 = vmatprep.subr.bf16.mxu0 0
    %1030 = vmatpush1.bf16.msra.mxu0 0
    %1031 = vmatprep.subr.bf16.mxu0 0
    %1032 = vmatpush1.bf16.msra.mxu0 0
    %1033 = vmatprep.subr.bf16.mxu0 0
    %1034 = vmatpush1.bf16.msra.mxu0 0
    %1035 = vmatprep.subr.bf16.mxu0 0
    %1036 = vmatpush1.bf16.msra.mxu0 0
    %1037 = vmatprep.subr.bf16.mxu0 0
    %1038 = vmatpush1.bf16.msra.mxu0 0
    %1039 = vmatprep.subr.bf16.mxu0 0
    %1040 = vmatpush1.bf16.msra.mxu0 0
    %1041 = vmatprep.subr.bf16.mxu0 0
    %1042 = vmatpush1.bf16.msra.mxu0 0
    %1043 = vmatprep.subr.bf16.mxu0 0
    %1044 = vmatpush1.bf16.msra.mxu0 0
    %1045 = vmatprep.subr.bf16.mxu0 0
    %1046 = vmatpush1.bf16.msra.mxu0 0
    %1047 = vmatprep.subr.bf16.mxu0 0
    %1048 = vmatpush1.bf16.msra.mxu0 0
    %1049 = vmatprep.subr.bf16.mxu0 0
    %1050 = vmatpush1.bf16.msra.mxu0 0
    %1051 = vmatprep.mubr.bf16.mxu0 0
    %1052 = vmatmul.mubr.bf16.gmra.mrb[0].mxu0 %v1014
    %v1053 = vpop.f32.mrb[0].mxu0
    %v1054 = vadd.f32 0.0, %v1053
    %v1055 = vpop.f32.mrb[0].mxu0
    %v1056 = vpop.f32.mrb[0].mxu0
    %v1057 = vpop.f32.mrb[0].mxu0
    %1058 = vdwg.mxu0
    %v1059 = vpack.c.bf16 %v715, %v715
    %1060 = vrot.lane.b32.xlu0 %v424, 40
    %v1061 = vpop.permute.xlu0 %1060
    %v1063 = vsel %vm226, %v1059, 0
    %v1066 = vsel %vm230, %v1061, 0
    %1068 = vmatprep.subr.bf16.mxu0 0
    %1069 = vmatpush1.bf16.msra.mxu0 %v1066
    %1070 = vmatprep.subr.bf16.mxu0 0
    %1071 = vmatpush1.bf16.msra.mxu0 0
    %1072 = vmatprep.subr.bf16.mxu0 0
    %1073 = vmatpush1.bf16.msra.mxu0 0
    %1074 = vmatprep.subr.bf16.mxu0 0
    %1075 = vmatpush1.bf16.msra.mxu0 0
    %1076 = vmatprep.subr.bf16.mxu0 0
    %1077 = vmatpush1.bf16.msra.mxu0 0
    %1078 = vmatprep.subr.bf16.mxu0 0
    %1079 = vmatpush1.bf16.msra.mxu0 0
    %1080 = vmatprep.subr.bf16.mxu0 0
    %1081 = vmatpush1.bf16.msra.mxu0 0
    %1082 = vmatprep.subr.bf16.mxu0 0
    %1083 = vmatpush1.bf16.msra.mxu0 0
    %1084 = vmatprep.subr.bf16.mxu0 0
    %1085 = vmatpush1.bf16.msra.mxu0 0
    %1086 = vmatprep.subr.bf16.mxu0 0
    %1087 = vmatpush1.bf16.msra.mxu0 0
    %1088 = vmatprep.subr.bf16.mxu0 0
    %1089 = vmatpush1.bf16.msra.mxu0 0
    %1090 = vmatprep.subr.bf16.mxu0 0
    %1091 = vmatpush1.bf16.msra.mxu0 0
    %1092 = vmatprep.subr.bf16.mxu0 0
    %1093 = vmatpush1.bf16.msra.mxu0 0
    %1094 = vmatprep.subr.bf16.mxu0 0
    %1095 = vmatpush1.bf16.msra.mxu0 0
    %1096 = vmatprep.subr.bf16.mxu0 0
    %1097 = vmatpush1.bf16.msra.mxu0 0
    %1098 = vmatprep.subr.bf16.mxu0 0
    %1099 = vmatpush1.bf16.msra.mxu0 0
    %1100 = vmatprep.mubr.bf16.mxu0 0
    %1101 = vmatmul.mubr.bf16.gmra.mrb[0].mxu0 %v1063
    %v1102 = vpop.f32.mrb[0].mxu0
    %v1103 = vadd.f32 0.0, %v1102
    %v1104 = vpop.f32.mrb[0].mxu0
    %v1105 = vpop.f32.mrb[0].mxu0
    %v1106 = vpop.f32.mrb[0].mxu0
    %1107 = vdwg.mxu0
    %1110 = vrot.lane.b32.xlu0 %v858, 8
    %v1111 = vpop.permute.xlu0 %1110
    %1112 = vrot.lane.b32.xlu0 %v907, 8
    %v1113 = vpop.permute.xlu0 %1112
    %1118 = vrot.lane.b32.xlu0 %v956, 16
    %v1119 = vpop.permute.xlu0 %1118
    %1120 = vrot.lane.b32.xlu0 %v1005, 16
    %v1121 = vpop.permute.xlu0 %1120
    %1126 = vrot.lane.b32.xlu0 %v1054, 24
    %v1127 = vpop.permute.xlu0 %1126
    %1128 = vrot.lane.b32.xlu0 %v1103, 24
    %v1129 = vpop.permute.xlu0 %1128
    %v1132 = vsel %vm226, %v760, %v1111
    %v1133 = vsel %vm226, %v809, %v1113
    %vm1134 = vcmask 130048
    %v1135 = vsel %vm1134, %v1132, %v1119
    %v1136 = vsel %vm1134, %v1133, %v1121
    %vm1137 = vcmask 195584
    %v1138 = vsel %vm1137, %v1135, %v1127
    %v1139 = vsel %vm1137, %v1136, %v1129
    %v1140 = vpack.c.bf16 %v1139, %v1138
    %v1141 = vld [vmem:[#allocation6] sm:$0xf]
    %v1142 = vld [vmem:[#allocation6 + $0x4] sm:$0xf]
    %v1143 = vld [vmem:[#allocation6 + $0x8] sm:$0xf]
    %v1144 = vld [vmem:[#allocation6 + $0xc] sm:$0xf]
    %v1149 = vunpack.c.l.b16 %v1141
    %v1150 = vunpack.c.l.b16 %v1142
    %v1151 = vunpack.c.l.b16 %v1143
    %v1152 = vunpack.c.l.b16 %v1144
    %v1153 = vpack.c.b16 %v1150, %v1149
    %v1154 = vpack.c.b16 %v1152, %v1151
    %v1158 = vsel %vm78, %v1140, 0
    %1160 = vmatprep.subr.bf16.mxu0 0
    %1161 = vmatpush1.bf16.msra.mxu0 %v1153
    %1162 = vmatprep.subr.bf16.mxu0 0
    %1163 = vmatpush1.bf16.msra.mxu0 %v1154
    %1164 = vmatprep.subr.bf16.mxu0 0
    %1165 = vmatpush1.bf16.msra.mxu0 0
    %1166 = vmatprep.subr.bf16.mxu0 0
    %1167 = vmatpush1.bf16.msra.mxu0 0
    %1168 = vmatprep.subr.bf16.mxu0 0
    %1169 = vmatpush1.bf16.msra.mxu0 0
    %1170 = vmatprep.subr.bf16.mxu0 0
    %1171 = vmatpush1.bf16.msra.mxu0 0
    %1172 = vmatprep.subr.bf16.mxu0 0
    %1173 = vmatpush1.bf16.msra.mxu0 0
    %1174 = vmatprep.subr.bf16.mxu0 0
    %1175 = vmatpush1.bf16.msra.mxu0 0
    %1176 = vmatprep.subr.bf16.mxu0 0
    %1177 = vmatpush1.bf16.msra.mxu0 0
    %1178 = vmatprep.subr.bf16.mxu0 0
    %1179 = vmatpush1.bf16.msra.mxu0 0
    %1180 = vmatprep.subr.bf16.mxu0 0
    %1181 = vmatpush1.bf16.msra.mxu0 0
    %1182 = vmatprep.subr.bf16.mxu0 0
    %1183 = vmatpush1.bf16.msra.mxu0 0
    %1184 = vmatprep.subr.bf16.mxu0 0
    %1185 = vmatpush1.bf16.msra.mxu0 0
    %1186 = vmatprep.subr.bf16.mxu0 0
    %1187 = vmatpush1.bf16.msra.mxu0 0
    %1188 = vmatprep.subr.bf16.mxu0 0
    %1189 = vmatpush1.bf16.msra.mxu0 0
    %1190 = vmatprep.subr.bf16.mxu0 0
    %1191 = vmatpush1.bf16.msra.mxu0 0
    %1192 = vmatprep.mubr.bf16.mxu0 0
    %1193 = vmatmul.mubr.bf16.gmra.mrb[0].mxu0 %v1158
    %v1194 = vpop.f32.mrb[0].mxu0
    %v1195 = vadd.f32 0.0, %v1194
    %v1196 = vpop.f32.mrb[0].mxu0
    %v1197 = vpop.f32.mrb[0].mxu0
    %v1198 = vadd.f32 0.0, %v1197
    %v1199 = vpop.f32.mrb[0].mxu0
    %1200 = vdwg.mxu0
    %v1201 = vadd.f32 %v72, %v1195
    %v1202 = vadd.f32 %v73, %v1198
    %v1203 = vld [vmem:[%s7 + $0x1] sm:$0x1]
    %v1204 = vlaneseq
    %v1205 = vshrl.u32 %v1204, 7
    %v1206 = vsub.s32 0, %v1205
    %v1207 = vrot.slane %v1203, %v1206
    %v1208 = vadd.f32 %v1201, %v1207
    %v1209 = vadd.f32 %v1202, %v1207
    %v1210 = vsel %vm78, %v1208, 0.0
    %1211 = vadd.xlane.f32.xlu0 %v1210
    %v1212 = vpop.xlane.xlu0 %1211
    %v1213 = vsel %vm78, %v1209, 0.0
    %1214 = vadd.xlane.f32.xlu0 %v1213
    %v1215 = vpop.xlane.xlu0 %1214
    %v1216 = vmul.f32 %v1208, %v1208
    %v1217 = vmul.f32 %v1209, %v1209
    %v1218 = vsel %vm78, %v1216, 0.0
    %1219 = vadd.xlane.f32.xlu0 %v1218
    %v1220 = vpop.xlane.xlu0 %1219
    %v1221 = vsel %vm78, %v1217, 0.0
    %1222 = vadd.xlane.f32.xlu0 %v1221
    %v1223 = vpop.xlane.xlu0 %1222
    %v1224 = vmul.f32 %v1212, 0.03125
    %v1225 = vmul.f32 %v1215, 0.03125
    %v1226 = vmul.f32 %v1224, 32.0
    %v1227 = vmul.f32 %v1225, 32.0
    %v1228 = vmul.f32 %v1226, %v1224
    %v1229 = vmul.f32 %v1227, %v1225
    %v1230 = vsub.f32 %v1220, %v1228
    %v1231 = vsub.f32 %v1223, %v1229
    %v1232 = vmul.f32 %v1230, 0.032258064
    %v1233 = vmul.f32 %v1231, 0.032258064
    %v1234 = vadd.f32 %v1232, 1e-06
    %v1235 = vadd.f32 %v1233, 1e-06
    %v1236 = vrsqrt.pop %v1234
    %v1237 = vrsqrt.pop %v1235
    %v1238 = vsub.f32 %v1208, %v1224
    %v1239 = vsub.f32 %v1209, %v1225
    %v1240 = vstv %s76
    %v1241 = vmul.f32 %v1240, %v1238
    %v1242 = vmul.f32 %v1240, %v1239
    %v1243 = vmul.f32 %v1241, %v1236
    %v1244 = vmul.f32 %v1242, %v1237
    %v1245 = vstv %s77
    %v1246 = vadd.f32 %v1243, %v1245
    %v1247 = vadd.f32 %v1244, %v1245
    %v1248 = vpack.c.bf16 %v1247, %v1246
    %v1249 = vld [vmem:[#allocation7] sm:$0xf]
    %v1250 = vld [vmem:[#allocation7 + $0x4] sm:$0xf]
    %v1251 = vld [vmem:[#allocation7 + $0x8] sm:$0xf]
    %v1252 = vld [vmem:[#allocation7 + $0xc] sm:$0xf]
    %v1253 = vld [vmem:[%s7 + $0x2] sm:$0x1]
    %v1254 = vlaneseq
    %v1255 = vshrl.u32 %v1254, 7
    %v1256 = vsub.s32 0, %v1255
    %v1257 = vrot.slane %v1253, %v1256
    %v1262 = vunpack.c.l.b16 %v1249
    %v1263 = vunpack.c.l.b16 %v1250
    %v1264 = vunpack.c.l.b16 %v1251
    %v1265 = vunpack.c.l.b16 %v1252
    %v1266 = vpack.c.b16 %v1263, %v1262
    %v1267 = vpack.c.b16 %v1265, %v1264
    %v1271 = vsel %vm78, %v1248, 0
    %1273 = vmatprep.subr.bf16.mxu0 0
    %1274 = vmatpush1.bf16.msra.mxu0 %v1266
    %1275 = vmatprep.subr.bf16.mxu0 0
    %1276 = vmatpush1.bf16.msra.mxu0 %v1267
    %1277 = vmatprep.subr.bf16.mxu0 0
    %1278 = vmatpush1.bf16.msra.mxu0 0
    %1279 = vmatprep.subr.bf16.mxu0 0
    %1280 = vmatpush1.bf16.msra.mxu0 0
    %1281 = vmatprep.subr.bf16.mxu0 0
    %1282 = vmatpush1.bf16.msra.mxu0 0
    %1283 = vmatprep.subr.bf16.mxu0 0
    %1284 = vmatpush1.bf16.msra.mxu0 0
    %1285 = vmatprep.subr.bf16.mxu0 0
    %1286 = vmatpush1.bf16.msra.mxu0 0
    %1287 = vmatprep.subr.bf16.mxu0 0
    %1288 = vmatpush1.bf16.msra.mxu0 0
    %1289 = vmatprep.subr.bf16.mxu0 0
    %1290 = vmatpush1.bf16.msra.mxu0 0
    %1291 = vmatprep.subr.bf16.mxu0 0
    %1292 = vmatpush1.bf16.msra.mxu0 0
    %1293 = vmatprep.subr.bf16.mxu0 0
    %1294 = vmatpush1.bf16.msra.mxu0 0
    %1295 = vmatprep.subr.bf16.mxu0 0
    %1296 = vmatpush1.bf16.msra.mxu0 0
    %1297 = vmatprep.subr.bf16.mxu0 0
    %1298 = vmatpush1.bf16.msra.mxu0 0
    %1299 = vmatprep.subr.bf16.mxu0 0
    %1300 = vmatpush1.bf16.msra.mxu0 0
    %1301 = vmatprep.subr.bf16.mxu0 0
    %1302 = vmatpush1.bf16.msra.mxu0 0
    %1303 = vmatprep.subr.bf16.mxu0 0
    %1304 = vmatpush1.bf16.msra.mxu0 0
    %1305 = vmatprep.mubr.bf16.mxu0 0
    %1306 = vmatmul.mubr.bf16.gmra.mrb[0].mxu0 %v1271
    %v1307 = vpop.f32.mrb[0].mxu0
    %v1308 = vadd.f32 %v1257, %v1307
    %v1309 = vpop.f32.mrb[0].mxu0
    %v1310 = vpop.f32.mrb[0].mxu0
    %v1311 = vadd.f32 %v1257, %v1310
    %v1312 = vpop.f32.mrb[0].mxu0
    %1313 = vdwg.mxu0
    %v1314 = vmax.f32 %v1308, 0.0
    %v1315 = vmax.f32 %v1311, 0.0
    %v1316 = vpack.c.bf16 %v1315, %v1314
    %v1317 = vld [vmem:[%s6] sm:$0xf]
    %v1318 = vld [vmem:[%s6 + $0x4] sm:$0xf]
    %v1319 = vld [vmem:[%s6 + $0x8] sm:$0xf]
    %v1320 = vld [vmem:[%s6 + $0xc] sm:$0xf]
    %v1321 = vld [vmem:[%s6 + $0x10] sm:$0xf]
    %v1322 = vld [vmem:[%s6 + $0x14] sm:$0xf]
    %v1323 = vld [vmem:[%s6 + $0x18] sm:$0xf]
    %v1324 = vld [vmem:[%s6 + $0x1c] sm:$0xf]
    %v1325 = vld [vmem:[%s7 + $0x3] sm:$0x1]
    %v1326 = vlaneseq
    %v1327 = vshrl.u32 %v1326, 7
    %v1328 = vsub.s32 0, %v1327
    %v1329 = vrot.slane %v1325, %v1328
    %v1338 = vunpack.c.l.b16 %v1317
    %v1339 = vunpack.c.l.b16 %v1318
    %v1340 = vunpack.c.l.b16 %v1319
    %v1341 = vunpack.c.l.b16 %v1320
    %v1342 = vunpack.c.l.b16 %v1321
    %v1343 = vunpack.c.l.b16 %v1322
    %v1344 = vunpack.c.l.b16 %v1323
    %v1345 = vunpack.c.l.b16 %v1324
    %v1346 = vpack.c.b16 %v1339, %v1338
    %v1347 = vpack.c.b16 %v1341, %v1340
    %v1348 = vpack.c.b16 %v1343, %v1342
    %v1349 = vpack.c.b16 %v1345, %v1344
    %vm1354 = vcmask 523264
    %v1356 = vsel %vm1354, %v1316, 0
    %1358 = vmatprep.subr.bf16.mxu0 0
    %1359 = vmatpush1.bf16.msra.mxu0 %v1346
    %1360 = vmatprep.subr.bf16.mxu0 0
    %1361 = vmatpush1.bf16.msra.mxu0 %v1347
    %1362 = vmatprep.subr.bf16.mxu0 0
    %1363 = vmatpush1.bf16.msra.mxu0 %v1348
    %1364 = vmatprep.subr.bf16.mxu0 0
    %1365 = vmatpush1.bf16.msra.mxu0 %v1349
    %1366 = vmatprep.subr.bf16.mxu0 0
    %1367 = vmatpush1.bf16.msra.mxu0 0
    %1368 = vmatprep.subr.bf16.mxu0 0
    %1369 = vmatpush1.bf16.msra.mxu0 0
    %1370 = vmatprep.subr.bf16.mxu0 0
    %1371 = vmatpush1.bf16.msra.mxu0 0
    %1372 = vmatprep.subr.bf16.mxu0 0
    %1373 = vmatpush1.bf16.msra.mxu0 0
    %1374 = vmatprep.subr.bf16.mxu0 0
    %1375 = vmatpush1.bf16.msra.mxu0 0
    %1376 = vmatprep.subr.bf16.mxu0 0
    %1377 = vmatpush1.bf16.msra.mxu0 0
    %1378 = vmatprep.subr.bf16.mxu0 0
    %1379 = vmatpush1.bf16.msra.mxu0 0
    %1380 = vmatprep.subr.bf16.mxu0 0
    %1381 = vmatpush1.bf16.msra.mxu0 0
    %1382 = vmatprep.subr.bf16.mxu0 0
    %1383 = vmatpush1.bf16.msra.mxu0 0
    %1384 = vmatprep.subr.bf16.mxu0 0
    %1385 = vmatpush1.bf16.msra.mxu0 0
    %1386 = vmatprep.subr.bf16.mxu0 0
    %1387 = vmatpush1.bf16.msra.mxu0 0
    %1388 = vmatprep.subr.bf16.mxu0 0
    %1389 = vmatpush1.bf16.msra.mxu0 0
    %1390 = vmatprep.mubr.bf16.mxu0 0
    %1391 = vmatmul.mubr.bf16.gmra.mrb[0].mxu0 %v1356
    %v1392 = vpop.f32.mrb[0].mxu0
    %v1393 = vadd.f32 %v1329, %v1392
    %v1394 = vpop.f32.mrb[0].mxu0
    %v1395 = vpop.f32.mrb[0].mxu0
    %v1396 = vadd.f32 %v1329, %v1395
    %v1397 = vpop.f32.mrb[0].mxu0
    %1398 = vdwg.mxu0
    %v1399 = vadd.f32 %v1208, %v1393
    %v1400 = vadd.f32 %v1209, %v1396
    %1401 = vst.msk [vmem:[#allocation9] sm:$0xff] %vm78, %v1399
    %1402 = vst.msk [vmem:[#allocation9 + $0x8] sm:$0xff] %vm78, %v1400
    // Predicated region
    $region46: #{tpu_custom_call.1} parent=1 // pred_check
      _
    $region47: #{tpu_custom_call.1} parent=1 // pred_check_branch
      %1404 = sbr.rel (0) target = $region49
    $region48: #{tpu_custom_call.1} parent=1 // pred_region
      %s1406 = ssub.s32 256, 256
      %1407 = vsyncadd [#allocation4], %s1406
      %s1408 = sshll.u32 [#allocation9], 4
      %s1409 = int_to_ptr.vmem [resolvable:$true] %s1408
      %1414 = dma.vmem_to_hbm [thread:$0]  %s1409, 256, %s8, [#allocation4], 128, 128, 8
    $region49: #{tpu_custom_call.1} parent=1 // pred_fallthru
      _
    // Predicated region
    $region50: #{tpu_custom_call.1} parent=1 // pred_check
      _
    $region51: #{tpu_custom_call.1} parent=1 // pred_check_branch
      %1416 = sbr.rel (0) target = $region53
    $region52: #{tpu_custom_call.1} parent=1 // pred_region
      %1417 = dma.done [#allocation4], 256
    $region53: #{tpu_custom_call.1} parent=1 // pred_fallthru
      _
    %1418 = vsyncpa [#allocation3], 1
    %1419 = vsyncpa [#allocation8], 1
    %1420 = vsyncpa [#allocation4], 1
    %1421 = vsyncpa [#allocation5], 1

</llo_original>
